<compile_context>
chip_gen: v5e
topology: v5e:2x2
jax: 0.10.0
libtpu: 0.0.40
codegen_flags: <defaults>
</compile_context>

<pallas_src>
import jax
import jax.numpy as jnp
from jax.experimental import pallas as pl
from jax.experimental.pallas import tpu as pltpu

ALPHA = 2.0  # kept for parity with Erf(alpha=2); unused in the forward pass

_MIN_PALLAS_BYTES = 2 << 20     # below ~2 MiB, fused XLA compare+cast wins
_TARGET_BLOCK_BYTES = 4 << 20   # ~4 MiB blocks: ~86% of HBM roofline, few steps
_BLOCK_FLOOR_BYTES = 1 << 20    # never shrink blocks below ~1 MiB for megacore
_VMEM_LIMIT_BYTES = 48 << 20    # explicit scoped-VMEM limit; safe on v5e..v7x


def _heaviside_kernel(x_ref, o_ref):
    o_ref[...] = (x_ref[...] >= 0).astype(o_ref.dtype)


def _sublane(dtype) -> int:
    # native sublane tiling minimum per dtype width
    return {4: 8, 2: 16, 1: 32}.get(jnp.dtype(dtype).itemsize, 8)


def _has_two_tensorcores() -> bool:
    # v7x has 2 TensorCores per chip; v5e/v6e have 1.  Detection failure is
    # harmless: we fall back to the single-TC strategy (largest block).
    try:
        kind = jax.devices()[0].device_kind.lower()
    except Exception:
        return False
    return "v7" in kind or "7x" in kind


def erf_forward(x: jax.Array, alpha: float = ALPHA) -> jax.Array:
    """Forward of the Erf surrogate module: heaviside(x), same shape & dtype."""
    del alpha  # only used in the (surrogate) backward
    orig_shape = x.shape
    dtype = x.dtype
    n = x.size
    itemsize = jnp.dtype(dtype).itemsize

    # Small tensors / non-lane-multiple sizes: plain elementwise XLA is both
    # correct and faster (no launch overhead, no extra HBM passes).
    if n * itemsize < _MIN_PALLAS_BYTES or n % 128 != 0:
        return (x >= 0).astype(dtype)

    sub = _sublane(dtype)

    # Widest lane-dense slab that reshapes for free (contiguous, no HBM copy):
    # wide lanes keep every store an unmasked full-vreg vst.
    lane = 128
    for cand in (8192, 4096, 2048, 1024, 512, 256, 128):
        if n % cand == 0 and (n // cand) >= sub:
            lane = cand
            break
    rows = n // lane
    x2d = x.reshape(rows, lane)

    row_bytes = lane * itemsize

    # Largest block <= ~4 MiB, aligned to the dtype's sublane tiling.
    tr = max(sub, (_TARGET_BLOCK_BYTES // row_bytes) // sub * sub)

    # Megacore (v7x only): give each TensorCore at least one block, but never
    # drop below ~1 MiB per block (per-step overhead dominates a pure DMA op).
    if _has_two_tensorcores():
        half = (rows // 2) // sub * sub
        if half >= sub and half * row_bytes >= _BLOCK_FLOOR_BYTES:
            tr = min(tr, half)

    if tr >= rows:
        tr = rows  # single block equal to the full array extent (always legal)
    elif rows % tr != 0:
        # Try rounding tr down a little so it divides rows evenly: avoids the
        # ragged masked tail block.  Only accept a modest shrink (>= tr/2).
        t = (tr // sub) * sub
        while t >= sub and t * 2 >= tr:
            if rows % t == 0:
                tr = t
                break
            t -= sub

    grid = (pl.cdiv(rows, tr),)  # any ragged final block is masked by Pallas

    out2d = pl.pallas_call(
        _heaviside_kernel,
        out_shape=jax.ShapeDtypeStruct((rows, lane), dtype),
        grid=grid,
        in_specs=[pl.BlockSpec((tr, lane), lambda i: (i, 0))],
        out_specs=pl.BlockSpec((tr, lane), lambda i: (i, 0)),
        compiler_params=pltpu.CompilerParams(
            dimension_semantics=("parallel",),
            vmem_limit_bytes=_VMEM_LIMIT_BYTES,
        ),
        cost_estimate=pl.CostEstimate(
            flops=n, transcendentals=0, bytes_accessed=2 * n * itemsize
        ),
    )(x2d)

    return out2d.reshape(orig_shape)


# TODO(synk): backward surrogate gradient (erf_backward: g * exp(-(alpha*x)^2)
# * alpha/sqrt(pi)) is autograd-only; add a jax.custom_vjp if training is needed.


if __name__ == "__main__":
    key = jax.random.PRNGKey(0)

    # Module-spec shape (NCHW, small): takes the fused-XLA fast path.
    x_small = jax.random.normal(key, (2, 4, 16, 16), dtype=jnp.float32)
    y_small = jax.block_until_ready(erf_forward(x_small, ALPHA))
    ref_small = (x_small >= 0).astype(x_small.dtype)
    assert y_small.shape == x_small.shape and y_small.dtype == x_small.dtype
    assert bool(jnp.all(y_small == ref_small))

    # Larger feature map (~2 MiB): exercises the Pallas kernel path.
    x_big = jax.random.normal(key, (2, 16, 128, 128), dtype=jnp.float32)
    y_big = jax.block_until_ready(erf_forward(x_big, ALPHA))
    ref_big = (x_big >= 0).astype(x_big.dtype)
    assert y_big.shape == x_big.shape and y_big.dtype == x_big.dtype
    assert bool(jnp.all(y_big == ref_big))

    print("KERNEL_OK")
</pallas_src>

<mosaic_0001>
module attributes {stable_mosaic.version = 11 : i64} {
  func.func @_heaviside_kernel(%arg0: i32, %arg1: memref<64x8192xf32, #tpu.memory_space<vmem>>, %arg2: memref<64x8192xf32, #tpu.memory_space<vmem>>) attributes {dimension_semantics = [#tpu.dimension_semantics<parallel>], iteration_bounds = array<i64: 1>, scalar_prefetch = 0 : i64, scratch_operands = 0 : i64, tpu.core_type = #tpu.core_type<tc>, window_params = [{transform_indices = @transform_0, window_bounds = array<i64: 64, 8192>}, {transform_indices = @transform_1, window_bounds = array<i64: 64, 8192>}]} {
    %c0 = arith.constant 0 : index
    %c0_0 = arith.constant 0 : index
    %0 = vector.load %arg1[%c0, %c0_0] : memref<64x8192xf32, #tpu.memory_space<vmem>>, vector<64x8192xf32>
    %cst = arith.constant 0.000000e+00 : f32
    %1 = vector.broadcast %cst : f32 to vector<64x8192xf32>
    %2 = arith.cmpf oge, %0, %1 : vector<64x8192xf32>
    %3 = arith.extui %2 : vector<64x8192xi1> to vector<64x8192xi32>
    %4 = arith.sitofp %3 : vector<64x8192xi32> to vector<64x8192xf32>
    %c0_1 = arith.constant 0 : index
    %c0_2 = arith.constant 0 : index
    %5 = vector.load %arg2[%c0_1, %c0_2] : memref<64x8192xf32, #tpu.memory_space<vmem>>, vector<64x8192xf32>
    tpu.vector_store %arg2[%c0_1, %c0_2], %4 {strides = array<i32>} : memref<64x8192xf32, #tpu.memory_space<vmem>>, vector<64x8192xf32>,
    return
  }
  func.func @transform_0(%arg0: i32) -> (i32, i32) {
    %c0_i32 = arith.constant 0 : i32
    %c0_i32_0 = arith.constant 0 : i32
    return %arg0, %c0_i32 : i32, i32
  }
  func.func @transform_1(%arg0: i32) -> (i32, i32) {
    %c0_i32 = arith.constant 0 : i32
    %c0_i32_0 = arith.constant 0 : i32
    return %arg0, %c0_i32 : i32, i32
  }
}

</mosaic_0001>

<llo_original>
// kernel: tpu_custom_call.1
$region0: #{tpu_custom_call.1}
  #allocation0 [shape = 'u32[]', space=smem, size = 0x4, offset = 0x4, fixed_abs, tag = 'smem constant byte address 0x4 - core index']
  #allocation1 [shape = 'u32[72,128]{1,0:T(1,128)}', space=vmem, size = 0x9000, scoped, tag = 'internal scratch']
  %s0 = inlined_call_operand.hbm [shape: f32[64,8192], index: 0, kind: input, shape index: {}]
  %s1 = inlined_call_operand.hbm [shape: f32[64,8192], index: 1, kind: output, shape index: {}]
  %s2 = sld [smem:[#allocation0]]
  $region18: #{tpu_custom_call.1} parent=0
    _
  %s4 = ssub.s32 1, %s2
  %s5 = scalar_select 0, %s4, %s2
  $region1: #{tpu_custom_call.1} parent=0
    #allocation2 [shape = 'u8[2097152]{0}', space=vmem, size = 0x200000, scoped, tag = 'input window, operand 0, single buffered']
    #allocation3 [shape = 's32[1]{0}', space=sflag, size = 0x4, scoped, tag = 'scoped memory for tpu_custom_call.1']
    #allocation4 [shape = 's32[1]{0}', space=sflag, size = 0x4, scoped, tag = 'scoped memory for tpu_custom_call.1']
    #allocation5 [shape = 'u8[2097152]{0}', space=vmem, size = 0x200000, scoped, tag = 'output window, operand 0, single buffered']
    %6 = vsyncpa [#allocation3], 0
    %7 = vsyncpa [#allocation4], 0
    // Predicated region
    $region2: #{tpu_custom_call.1} parent=1 // pred_check
      _
    $region3: #{tpu_custom_call.1} parent=1 // pred_check_branch
      %9 = sbr.rel (0) target = $region5
    $region4: #{tpu_custom_call.1} parent=1 // pred_region
      %11 = vsyncadd [#allocation3], 0
      %s12 = sshll.u32 %s0, 4
      %s13 = int_to_ptr.hbm [resolvable:$true] %s12
      %s14 = sshll.u32 [#allocation2], 4
      %s15 = int_to_ptr.vmem [resolvable:$true] %s14
      %20 = dma.hbm_to_vmem [thread:$0]  %s13, 65536, %s15, [#allocation3], 8192, 8192, 512
    $region5: #{tpu_custom_call.1} parent=1 // pred_fallthru
      _
    // Predicated region
    $region6: #{tpu_custom_call.1} parent=1 // pred_check
      _
    $region7: #{tpu_custom_call.1} parent=1 // pred_check_branch
      %22 = sbr.rel (0) target = $region9
    $region8: #{tpu_custom_call.1} parent=1 // pred_region
      %24 = dma.done [#allocation3], 65536
    $region9: #{tpu_custom_call.1} parent=1 // pred_fallthru
      _
    %v25 = vld [vmem:[#allocation2] sm:$0xff]
    %v26 = vld [vmem:[#allocation2 + $0x8] sm:$0xff]
    %v27 = vld [vmem:[#allocation2 + $0x10] sm:$0xff]
    %v28 = vld [vmem:[#allocation2 + $0x18] sm:$0xff]
    %v29 = vld [vmem:[#allocation2 + $0x20] sm:$0xff]
    %v30 = vld [vmem:[#allocation2 + $0x28] sm:$0xff]
    %v31 = vld [vmem:[#allocation2 + $0x30] sm:$0xff]
    %v32 = vld [vmem:[#allocation2 + $0x38] sm:$0xff]
    %v33 = vld [vmem:[#allocation2 + $0x40] sm:$0xff]
    %v34 = vld [vmem:[#allocation2 + $0x48] sm:$0xff]
    %v35 = vld [vmem:[#allocation2 + $0x50] sm:$0xff]
    %v36 = vld [vmem:[#allocation2 + $0x58] sm:$0xff]
    %v37 = vld [vmem:[#allocation2 + $0x60] sm:$0xff]
    %v38 = vld [vmem:[#allocation2 + $0x68] sm:$0xff]
    %v39 = vld [vmem:[#allocation2 + $0x70] sm:$0xff]
    %v40 = vld [vmem:[#allocation2 + $0x78] sm:$0xff]
    %v41 = vld [vmem:[#allocation2 + $0x80] sm:$0xff]
    %v42 = vld [vmem:[#allocation2 + $0x88] sm:$0xff]
    %v43 = vld [vmem:[#allocation2 + $0x90] sm:$0xff]
    %v44 = vld [vmem:[#allocation2 + $0x98] sm:$0xff]
    %v45 = vld [vmem:[#allocation2 + $0xa0] sm:$0xff]
    %v46 = vld [vmem:[#allocation2 + $0xa8] sm:$0xff]
    %v47 = vld [vmem:[#allocation2 + $0xb0] sm:$0xff]
    %v48 = vld [vmem:[#allocation2 + $0xb8] sm:$0xff]
    %v49 = vld [vmem:[#allocation2 + $0xc0] sm:$0xff]
    %v50 = vld [vmem:[#allocation2 + $0xc8] sm:$0xff]
    %v51 = vld [vmem:[#allocation2 + $0xd0] sm:$0xff]
    %v52 = vld [vmem:[#allocation2 + $0xd8] sm:$0xff]
    %v53 = vld [vmem:[#allocation2 + $0xe0] sm:$0xff]
    %v54 = vld [vmem:[#allocation2 + $0xe8] sm:$0xff]
    %v55 = vld [vmem:[#allocation2 + $0xf0] sm:$0xff]
    %v56 = vld [vmem:[#allocation2 + $0xf8] sm:$0xff]
    %v57 = vld [vmem:[#allocation2 + $0x100] sm:$0xff]
    %v58 = vld [vmem:[#allocation2 + $0x108] sm:$0xff]
    %v59 = vld [vmem:[#allocation2 + $0x110] sm:$0xff]
    %v60 = vld [vmem:[#allocation2 + $0x118] sm:$0xff]
    %v61 = vld [vmem:[#allocation2 + $0x120] sm:$0xff]
    %v62 = vld [vmem:[#allocation2 + $0x128] sm:$0xff]
    %v63 = vld [vmem:[#allocation2 + $0x130] sm:$0xff]
    %v64 = vld [vmem:[#allocation2 + $0x138] sm:$0xff]
    %v65 = vld [vmem:[#allocation2 + $0x140] sm:$0xff]
    %v66 = vld [vmem:[#allocation2 + $0x148] sm:$0xff]
    %v67 = vld [vmem:[#allocation2 + $0x150] sm:$0xff]
    %v68 = vld [vmem:[#allocation2 + $0x158] sm:$0xff]
    %v69 = vld [vmem:[#allocation2 + $0x160] sm:$0xff]
    %v70 = vld [vmem:[#allocation2 + $0x168] sm:$0xff]
    %v71 = vld [vmem:[#allocation2 + $0x170] sm:$0xff]
    %v72 = vld [vmem:[#allocation2 + $0x178] sm:$0xff]
    %v73 = vld [vmem:[#allocation2 + $0x180] sm:$0xff]
    %v74 = vld [vmem:[#allocation2 + $0x188] sm:$0xff]
    %v75 = vld [vmem:[#allocation2 + $0x190] sm:$0xff]
    %v76 = vld [vmem:[#allocation2 + $0x198] sm:$0xff]
    %v77 = vld [vmem:[#allocation2 + $0x1a0] sm:$0xff]
    %v78 = vld [vmem:[#allocation2 + $0x1a8] sm:$0xff]
    %v79 = vld [vmem:[#allocation2 + $0x1b0] sm:$0xff]
    %v80 = vld [vmem:[#allocation2 + $0x1b8] sm:$0xff]
    %v81 = vld [vmem:[#allocation2 + $0x1c0] sm:$0xff]
    %v82 = vld [vmem:[#allocation2 + $0x1c8] sm:$0xff]
    %v83 = vld [vmem:[#allocation2 + $0x1d0] sm:$0xff]
    %v84 = vld [vmem:[#allocation2 + $0x1d8] sm:$0xff]
    %v85 = vld [vmem:[#allocation2 + $0x1e0] sm:$0xff]
    %v86 = vld [vmem:[#allocation2 + $0x1e8] sm:$0xff]
    %v87 = vld [vmem:[#allocation2 + $0x1f0] sm:$0xff]
    %v88 = vld [vmem:[#allocation2 + $0x1f8] sm:$0xff]
    %v89 = vld [vmem:[#allocation2 + $0x200] sm:$0xff]
    %v90 = vld [vmem:[#allocation2 + $0x208] sm:$0xff]
    %v91 = vld [vmem:[#allocation2 + $0x210] sm:$0xff]
    %v92 = vld [vmem:[#allocation2 + $0x218] sm:$0xff]
    %v93 = vld [vmem:[#allocation2 + $0x220] sm:$0xff]
    %v94 = vld [vmem:[#allocation2 + $0x228] sm:$0xff]
    %v95 = vld [vmem:[#allocation2 + $0x230] sm:$0xff]
    %v96 = vld [vmem:[#allocation2 + $0x238] sm:$0xff]
    %v97 = vld [vmem:[#allocation2 + $0x240] sm:$0xff]
    %v98 = vld [vmem:[#allocation2 + $0x248] sm:$0xff]
    %v99 = vld [vmem:[#allocation2 + $0x250] sm:$0xff]
    %v100 = vld [vmem:[#allocation2 + $0x258] sm:$0xff]
    %v101 = vld [vmem:[#allocation2 + $0x260] sm:$0xff]
    %v102 = vld [vmem:[#allocation2 + $0x268] sm:$0xff]
    %v103 = vld [vmem:[#allocation2 + $0x270] sm:$0xff]
    %v104 = vld [vmem:[#allocation2 + $0x278] sm:$0xff]
    %v105 = vld [vmem:[#allocation2 + $0x280] sm:$0xff]
    %v106 = vld [vmem:[#allocation2 + $0x288] sm:$0xff]
    %v107 = vld [vmem:[#allocation2 + $0x290] sm:$0xff]
    %v108 = vld [vmem:[#allocation2 + $0x298] sm:$0xff]
    %v109 = vld [vmem:[#allocation2 + $0x2a0] sm:$0xff]
    %v110 = vld [vmem:[#allocation2 + $0x2a8] sm:$0xff]
    %v111 = vld [vmem:[#allocation2 + $0x2b0] sm:$0xff]
    %v112 = vld [vmem:[#allocation2 + $0x2b8] sm:$0xff]
    %v113 = vld [vmem:[#allocation2 + $0x2c0] sm:$0xff]
    %v114 = vld [vmem:[#allocation2 + $0x2c8] sm:$0xff]
    %v115 = vld [vmem:[#allocation2 + $0x2d0] sm:$0xff]
    %v116 = vld [vmem:[#allocation2 + $0x2d8] sm:$0xff]
    %v117 = vld [vmem:[#allocation2 + $0x2e0] sm:$0xff]
    %v118 = vld [vmem:[#allocation2 + $0x2e8] sm:$0xff]
    %v119 = vld [vmem:[#allocation2 + $0x2f0] sm:$0xff]
    %v120 = vld [vmem:[#allocation2 + $0x2f8] sm:$0xff]
    %v121 = vld [vmem:[#allocation2 + $0x300] sm:$0xff]
    %v122 = vld [vmem:[#allocation2 + $0x308] sm:$0xff]
    %v123 = vld [vmem:[#allocation2 + $0x310] sm:$0xff]
    %v124 = vld [vmem:[#allocation2 + $0x318] sm:$0xff]
    %v125 = vld [vmem:[#allocation2 + $0x320] sm:$0xff]
    %v126 = vld [vmem:[#allocation2 + $0x328] sm:$0xff]
    %v127 = vld [vmem:[#allocation2 + $0x330] sm:$0xff]
    %v128 = vld [vmem:[#allocation2 + $0x338] sm:$0xff]
    %v129 = vld [vmem:[#allocation2 + $0x340] sm:$0xff]
    %v130 = vld [vmem:[#allocation2 + $0x348] sm:$0xff]
    %v131 = vld [vmem:[#allocation2 + $0x350] sm:$0xff]
    %v132 = vld [vmem:[#allocation2 + $0x358] sm:$0xff]
    %v133 = vld [vmem:[#allocation2 + $0x360] sm:$0xff]
    %v134 = vld [vmem:[#allocation2 + $0x368] sm:$0xff]
    %v135 = vld [vmem:[#allocation2 + $0x370] sm:$0xff]
    %v136 = vld [vmem:[#allocation2 + $0x378] sm:$0xff]
    %v137 = vld [vmem:[#allocation2 + $0x380] sm:$0xff]
    %v138 = vld [vmem:[#allocation2 + $0x388] sm:$0xff]
    %v139 = vld [vmem:[#allocation2 + $0x390] sm:$0xff]
    %v140 = vld [vmem:[#allocation2 + $0x398] sm:$0xff]
    %v141 = vld [vmem:[#allocation2 + $0x3a0] sm:$0xff]
    %v142 = vld [vmem:[#allocation2 + $0x3a8] sm:$0xff]
    %v143 = vld [vmem:[#allocation2 + $0x3b0] sm:$0xff]
    %v144 = vld [vmem:[#allocation2 + $0x3b8] sm:$0xff]
    %v145 = vld [vmem:[#allocation2 + $0x3c0] sm:$0xff]
    %v146 = vld [vmem:[#allocation2 + $0x3c8] sm:$0xff]
    %v147 = vld [vmem:[#allocation2 + $0x3d0] sm:$0xff]
    %v148 = vld [vmem:[#allocation2 + $0x3d8] sm:$0xff]
    %v149 = vld [vmem:[#allocation2 + $0x3e0] sm:$0xff]
    %v150 = vld [vmem:[#allocation2 + $0x3e8] sm:$0xff]
    %v151 = vld [vmem:[#allocation2 + $0x3f0] sm:$0xff]
    %v152 = vld [vmem:[#allocation2 + $0x3f8] sm:$0xff]
    %v153 = vld [vmem:[#allocation2 + $0x400] sm:$0xff]
    %v154 = vld [vmem:[#allocation2 + $0x408] sm:$0xff]
    %v155 = vld [vmem:[#allocation2 + $0x410] sm:$0xff]
    %v156 = vld [vmem:[#allocation2 + $0x418] sm:$0xff]
    %v157 = vld [vmem:[#allocation2 + $0x420] sm:$0xff]
    %v158 = vld [vmem:[#allocation2 + $0x428] sm:$0xff]
    %v159 = vld [vmem:[#allocation2 + $0x430] sm:$0xff]
    %v160 = vld [vmem:[#allocation2 + $0x438] sm:$0xff]
    %v161 = vld [vmem:[#allocation2 + $0x440] sm:$0xff]
    %v162 = vld [vmem:[#allocation2 + $0x448] sm:$0xff]
    %v163 = vld [vmem:[#allocation2 + $0x450] sm:$0xff]
    %v164 = vld [vmem:[#allocation2 + $0x458] sm:$0xff]
    %v165 = vld [vmem:[#allocation2 + $0x460] sm:$0xff]
    %v166 = vld [vmem:[#allocation2 + $0x468] sm:$0xff]
    %v167 = vld [vmem:[#allocation2 + $0x470] sm:$0xff]
    %v168 = vld [vmem:[#allocation2 + $0x478] sm:$0xff]
    %v169 = vld [vmem:[#allocation2 + $0x480] sm:$0xff]
    %v170 = vld [vmem:[#allocation2 + $0x488] sm:$0xff]
    %v171 = vld [vmem:[#allocation2 + $0x490] sm:$0xff]
    %v172 = vld [vmem:[#allocation2 + $0x498] sm:$0xff]
    %v173 = vld [vmem:[#allocation2 + $0x4a0] sm:$0xff]
    %v174 = vld [vmem:[#allocation2 + $0x4a8] sm:$0xff]
    %v175 = vld [vmem:[#allocation2 + $0x4b0] sm:$0xff]
    %v176 = vld [vmem:[#allocation2 + $0x4b8] sm:$0xff]
    %v177 = vld [vmem:[#allocation2 + $0x4c0] sm:$0xff]
    %v178 = vld [vmem:[#allocation2 + $0x4c8] sm:$0xff]
    %v179 = vld [vmem:[#allocation2 + $0x4d0] sm:$0xff]
    %v180 = vld [vmem:[#allocation2 + $0x4d8] sm:$0xff]
    %v181 = vld [vmem:[#allocation2 + $0x4e0] sm:$0xff]
    %v182 = vld [vmem:[#allocation2 + $0x4e8] sm:$0xff]
    %v183 = vld [vmem:[#allocation2 + $0x4f0] sm:$0xff]
    %v184 = vld [vmem:[#allocation2 + $0x4f8] sm:$0xff]
    %v185 = vld [vmem:[#allocation2 + $0x500] sm:$0xff]
    %v186 = vld [vmem:[#allocation2 + $0x508] sm:$0xff]
    %v187 = vld [vmem:[#allocation2 + $0x510] sm:$0xff]
    %v188 = vld [vmem:[#allocation2 + $0x518] sm:$0xff]
    %v189 = vld [vmem:[#allocation2 + $0x520] sm:$0xff]
    %v190 = vld [vmem:[#allocation2 + $0x528] sm:$0xff]
    %v191 = vld [vmem:[#allocation2 + $0x530] sm:$0xff]
    %v192 = vld [vmem:[#allocation2 + $0x538] sm:$0xff]
    %v193 = vld [vmem:[#allocation2 + $0x540] sm:$0xff]
    %v194 = vld [vmem:[#allocation2 + $0x548] sm:$0xff]
    %v195 = vld [vmem:[#allocation2 + $0x550] sm:$0xff]
    %v196 = vld [vmem:[#allocation2 + $0x558] sm:$0xff]
    %v197 = vld [vmem:[#allocation2 + $0x560] sm:$0xff]
    %v198 = vld [vmem:[#allocation2 + $0x568] sm:$0xff]
    %v199 = vld [vmem:[#allocation2 + $0x570] sm:$0xff]
    %v200 = vld [vmem:[#allocation2 + $0x578] sm:$0xff]
    %v201 = vld [vmem:[#allocation2 + $0x580] sm:$0xff]
    %v202 = vld [vmem:[#allocation2 + $0x588] sm:$0xff]
    %v203 = vld [vmem:[#allocation2 + $0x590] sm:$0xff]
    %v204 = vld [vmem:[#allocation2 + $0x598] sm:$0xff]
    %v205 = vld [vmem:[#allocation2 + $0x5a0] sm:$0xff]
    %v206 = vld [vmem:[#allocation2 + $0x5a8] sm:$0xff]
    %v207 = vld [vmem:[#allocation2 + $0x5b0] sm:$0xff]
    %v208 = vld [vmem:[#allocation2 + $0x5b8] sm:$0xff]
    %v209 = vld [vmem:[#allocation2 + $0x5c0] sm:$0xff]
    %v210 = vld [vmem:[#allocation2 + $0x5c8] sm:$0xff]
    %v211 = vld [vmem:[#allocation2 + $0x5d0] sm:$0xff]
    %v212 = vld [vmem:[#allocation2 + $0x5d8] sm:$0xff]
    %v213 = vld [vmem:[#allocation2 + $0x5e0] sm:$0xff]
    %v214 = vld [vmem:[#allocation2 + $0x5e8] sm:$0xff]
    %v215 = vld [vmem:[#allocation2 + $0x5f0] sm:$0xff]
    %v216 = vld [vmem:[#allocation2 + $0x5f8] sm:$0xff]
    %v217 = vld [vmem:[#allocation2 + $0x600] sm:$0xff]
    %v218 = vld [vmem:[#allocation2 + $0x608] sm:$0xff]
    %v219 = vld [vmem:[#allocation2 + $0x610] sm:$0xff]
    %v220 = vld [vmem:[#allocation2 + $0x618] sm:$0xff]
    %v221 = vld [vmem:[#allocation2 + $0x620] sm:$0xff]
    %v222 = vld [vmem:[#allocation2 + $0x628] sm:$0xff]
    %v223 = vld [vmem:[#allocation2 + $0x630] sm:$0xff]
    %v224 = vld [vmem:[#allocation2 + $0x638] sm:$0xff]
    %v225 = vld [vmem:[#allocation2 + $0x640] sm:$0xff]
    %v226 = vld [vmem:[#allocation2 + $0x648] sm:$0xff]
    %v227 = vld [vmem:[#allocation2 + $0x650] sm:$0xff]
    %v228 = vld [vmem:[#allocation2 + $0x658] sm:$0xff]
    %v229 = vld [vmem:[#allocation2 + $0x660] sm:$0xff]
    %v230 = vld [vmem:[#allocation2 + $0x668] sm:$0xff]
    %v231 = vld [vmem:[#allocation2 + $0x670] sm:$0xff]
    %v232 = vld [vmem:[#allocation2 + $0x678] sm:$0xff]
    %v233 = vld [vmem:[#allocation2 + $0x680] sm:$0xff]
    %v234 = vld [vmem:[#allocation2 + $0x688] sm:$0xff]
    %v235 = vld [vmem:[#allocation2 + $0x690] sm:$0xff]
    %v236 = vld [vmem:[#allocation2 + $0x698] sm:$0xff]
    %v237 = vld [vmem:[#allocation2 + $0x6a0] sm:$0xff]
    %v238 = vld [vmem:[#allocation2 + $0x6a8] sm:$0xff]
    %v239 = vld [vmem:[#allocation2 + $0x6b0] sm:$0xff]
    %v240 = vld [vmem:[#allocation2 + $0x6b8] sm:$0xff]
    %v241 = vld [vmem:[#allocation2 + $0x6c0] sm:$0xff]
    %v242 = vld [vmem:[#allocation2 + $0x6c8] sm:$0xff]
    %v243 = vld [vmem:[#allocation2 + $0x6d0] sm:$0xff]
    %v244 = vld [vmem:[#allocation2 + $0x6d8] sm:$0xff]
    %v245 = vld [vmem:[#allocation2 + $0x6e0] sm:$0xff]
    %v246 = vld [vmem:[#allocation2 + $0x6e8] sm:$0xff]
    %v247 = vld [vmem:[#allocation2 + $0x6f0] sm:$0xff]
    %v248 = vld [vmem:[#allocation2 + $0x6f8] sm:$0xff]
    %v249 = vld [vmem:[#allocation2 + $0x700] sm:$0xff]
    %v250 = vld [vmem:[#allocation2 + $0x708] sm:$0xff]
    %v251 = vld [vmem:[#allocation2 + $0x710] sm:$0xff]
    %v252 = vld [vmem:[#allocation2 + $0x718] sm:$0xff]
    %v253 = vld [vmem:[#allocation2 + $0x720] sm:$0xff]
    %v254 = vld [vmem:[#allocation2 + $0x728] sm:$0xff]
    %v255 = vld [vmem:[#allocation2 + $0x730] sm:$0xff]
    %v256 = vld [vmem:[#allocation2 + $0x738] sm:$0xff]
    %v257 = vld [vmem:[#allocation2 + $0x740] sm:$0xff]
    %v258 = vld [vmem:[#allocation2 + $0x748] sm:$0xff]
    %v259 = vld [vmem:[#allocation2 + $0x750] sm:$0xff]
    %v260 = vld [vmem:[#allocation2 + $0x758] sm:$0xff]
    %v261 = vld [vmem:[#allocation2 + $0x760] sm:$0xff]
    %v262 = vld [vmem:[#allocation2 + $0x768] sm:$0xff]
    %v263 = vld [vmem:[#allocation2 + $0x770] sm:$0xff]
    %v264 = vld [vmem:[#allocation2 + $0x778] sm:$0xff]
    %v265 = vld [vmem:[#allocation2 + $0x780] sm:$0xff]
    %v266 = vld [vmem:[#allocation2 + $0x788] sm:$0xff]
    %v267 = vld [vmem:[#allocation2 + $0x790] sm:$0xff]
    %v268 = vld [vmem:[#allocation2 + $0x798] sm:$0xff]
    %v269 = vld [vmem:[#allocation2 + $0x7a0] sm:$0xff]
    %v270 = vld [vmem:[#allocation2 + $0x7a8] sm:$0xff]
    %v271 = vld [vmem:[#allocation2 + $0x7b0] sm:$0xff]
    %v272 = vld [vmem:[#allocation2 + $0x7b8] sm:$0xff]
    %v273 = vld [vmem:[#allocation2 + $0x7c0] sm:$0xff]
    %v274 = vld [vmem:[#allocation2 + $0x7c8] sm:$0xff]
    %v275 = vld [vmem:[#allocation2 + $0x7d0] sm:$0xff]
    %v276 = vld [vmem:[#allocation2 + $0x7d8] sm:$0xff]
    %v277 = vld [vmem:[#allocation2 + $0x7e0] sm:$0xff]
    %v278 = vld [vmem:[#allocation2 + $0x7e8] sm:$0xff]
    %v279 = vld [vmem:[#allocation2 + $0x7f0] sm:$0xff]
    %v280 = vld [vmem:[#allocation2 + $0x7f8] sm:$0xff]
    %v281 = vld [vmem:[#allocation2 + $0x800] sm:$0xff]
    %v282 = vld [vmem:[#allocation2 + $0x808] sm:$0xff]
    %v283 = vld [vmem:[#allocation2 + $0x810] sm:$0xff]
    %v284 = vld [vmem:[#allocation2 + $0x818] sm:$0xff]
    %v285 = vld [vmem:[#allocation2 + $0x820] sm:$0xff]
    %v286 = vld [vmem:[#allocation2 + $0x828] sm:$0xff]
    %v287 = vld [vmem:[#allocation2 + $0x830] sm:$0xff]
    %v288 = vld [vmem:[#allocation2 + $0x838] sm:$0xff]
    %v289 = vld [vmem:[#allocation2 + $0x840] sm:$0xff]
    %v290 = vld [vmem:[#allocation2 + $0x848] sm:$0xff]
    %v291 = vld [vmem:[#allocation2 + $0x850] sm:$0xff]
    %v292 = vld [vmem:[#allocation2 + $0x858] sm:$0xff]
    %v293 = vld [vmem:[#allocation2 + $0x860] sm:$0xff]
    %v294 = vld [vmem:[#allocation2 + $0x868] sm:$0xff]
    %v295 = vld [vmem:[#allocation2 + $0x870] sm:$0xff]
    %v296 = vld [vmem:[#allocation2 + $0x878] sm:$0xff]
    %v297 = vld [vmem:[#allocation2 + $0x880] sm:$0xff]
    %v298 = vld [vmem:[#allocation2 + $0x888] sm:$0xff]
    %v299 = vld [vmem:[#allocation2 + $0x890] sm:$0xff]
    %v300 = vld [vmem:[#allocation2 + $0x898] sm:$0xff]
    %v301 = vld [vmem:[#allocation2 + $0x8a0] sm:$0xff]
    %v302 = vld [vmem:[#allocation2 + $0x8a8] sm:$0xff]
    %v303 = vld [vmem:[#allocation2 + $0x8b0] sm:$0xff]
    %v304 = vld [vmem:[#allocation2 + $0x8b8] sm:$0xff]
    %v305 = vld [vmem:[#allocation2 + $0x8c0] sm:$0xff]
    %v306 = vld [vmem:[#allocation2 + $0x8c8] sm:$0xff]
    %v307 = vld [vmem:[#allocation2 + $0x8d0] sm:$0xff]
    %v308 = vld [vmem:[#allocation2 + $0x8d8] sm:$0xff]
    %v309 = vld [vmem:[#allocation2 + $0x8e0] sm:$0xff]
    %v310 = vld [vmem:[#allocation2 + $0x8e8] sm:$0xff]
    %v311 = vld [vmem:[#allocation2 + $0x8f0] sm:$0xff]
    %v312 = vld [vmem:[#allocation2 + $0x8f8] sm:$0xff]
    %v313 = vld [vmem:[#allocation2 + $0x900] sm:$0xff]
    %v314 = vld [vmem:[#allocation2 + $0x908] sm:$0xff]
    %v315 = vld [vmem:[#allocation2 + $0x910] sm:$0xff]
    %v316 = vld [vmem:[#allocation2 + $0x918] sm:$0xff]
    %v317 = vld [vmem:[#allocation2 + $0x920] sm:$0xff]
    %v318 = vld [vmem:[#allocation2 + $0x928] sm:$0xff]
    %v319 = vld [vmem:[#allocation2 + $0x930] sm:$0xff]
    %v320 = vld [vmem:[#allocation2 + $0x938] sm:$0xff]
    %v321 = vld [vmem:[#allocation2 + $0x940] sm:$0xff]
    %v322 = vld [vmem:[#allocation2 + $0x948] sm:$0xff]
    %v323 = vld [vmem:[#allocation2 + $0x950] sm:$0xff]
    %v324 = vld [vmem:[#allocation2 + $0x958] sm:$0xff]
    %v325 = vld [vmem:[#allocation2 + $0x960] sm:$0xff]
    %v326 = vld [vmem:[#allocation2 + $0x968] sm:$0xff]
    %v327 = vld [vmem:[#allocation2 + $0x970] sm:$0xff]
    %v328 = vld [vmem:[#allocation2 + $0x978] sm:$0xff]
    %v329 = vld [vmem:[#allocation2 + $0x980] sm:$0xff]
    %v330 = vld [vmem:[#allocation2 + $0x988] sm:$0xff]
    %v331 = vld [vmem:[#allocation2 + $0x990] sm:$0xff]
    %v332 = vld [vmem:[#allocation2 + $0x998] sm:$0xff]
    %v333 = vld [vmem:[#allocation2 + $0x9a0] sm:$0xff]
    %v334 = vld [vmem:[#allocation2 + $0x9a8] sm:$0xff]
    %v335 = vld [vmem:[#allocation2 + $0x9b0] sm:$0xff]
    %v336 = vld [vmem:[#allocation2 + $0x9b8] sm:$0xff]
    %v337 = vld [vmem:[#allocation2 + $0x9c0] sm:$0xff]
    %v338 = vld [vmem:[#allocation2 + $0x9c8] sm:$0xff]
    %v339 = vld [vmem:[#allocation2 + $0x9d0] sm:$0xff]
    %v340 = vld [vmem:[#allocation2 + $0x9d8] sm:$0xff]
    %v341 = vld [vmem:[#allocation2 + $0x9e0] sm:$0xff]
    %v342 = vld [vmem:[#allocation2 + $0x9e8] sm:$0xff]
    %v343 = vld [vmem:[#allocation2 + $0x9f0] sm:$0xff]
    %v344 = vld [vmem:[#allocation2 + $0x9f8] sm:$0xff]
    %v345 = vld [vmem:[#allocation2 + $0xa00] sm:$0xff]
    %v346 = vld [vmem:[#allocation2 + $0xa08] sm:$0xff]
    %v347 = vld [vmem:[#allocation2 + $0xa10] sm:$0xff]
    %v348 = vld [vmem:[#allocation2 + $0xa18] sm:$0xff]
    %v349 = vld [vmem:[#allocation2 + $0xa20] sm:$0xff]
    %v350 = vld [vmem:[#allocation2 + $0xa28] sm:$0xff]
    %v351 = vld [vmem:[#allocation2 + $0xa30] sm:$0xff]
    %v352 = vld [vmem:[#allocation2 + $0xa38] sm:$0xff]
    %v353 = vld [vmem:[#allocation2 + $0xa40] sm:$0xff]
    %v354 = vld [vmem:[#allocation2 + $0xa48] sm:$0xff]
    %v355 = vld [vmem:[#allocation2 + $0xa50] sm:$0xff]
    %v356 = vld [vmem:[#allocation2 + $0xa58] sm:$0xff]
    %v357 = vld [vmem:[#allocation2 + $0xa60] sm:$0xff]
    %v358 = vld [vmem:[#allocation2 + $0xa68] sm:$0xff]
    %v359 = vld [vmem:[#allocation2 + $0xa70] sm:$0xff]
    %v360 = vld [vmem:[#allocation2 + $0xa78] sm:$0xff]
    %v361 = vld [vmem:[#allocation2 + $0xa80] sm:$0xff]
    %v362 = vld [vmem:[#allocation2 + $0xa88] sm:$0xff]
    %v363 = vld [vmem:[#allocation2 + $0xa90] sm:$0xff]
    %v364 = vld [vmem:[#allocation2 + $0xa98] sm:$0xff]
    %v365 = vld [vmem:[#allocation2 + $0xaa0] sm:$0xff]
    %v366 = vld [vmem:[#allocation2 + $0xaa8] sm:$0xff]
    %v367 = vld [vmem:[#allocation2 + $0xab0] sm:$0xff]
    %v368 = vld [vmem:[#allocation2 + $0xab8] sm:$0xff]
    %v369 = vld [vmem:[#allocation2 + $0xac0] sm:$0xff]
    %v370 = vld [vmem:[#allocation2 + $0xac8] sm:$0xff]
    %v371 = vld [vmem:[#allocation2 + $0xad0] sm:$0xff]
    %v372 = vld [vmem:[#allocation2 + $0xad8] sm:$0xff]
    %v373 = vld [vmem:[#allocation2 + $0xae0] sm:$0xff]
    %v374 = vld [vmem:[#allocation2 + $0xae8] sm:$0xff]
    %v375 = vld [vmem:[#allocation2 + $0xaf0] sm:$0xff]
    %v376 = vld [vmem:[#allocation2 + $0xaf8] sm:$0xff]
    %v377 = vld [vmem:[#allocation2 + $0xb00] sm:$0xff]
    %v378 = vld [vmem:[#allocation2 + $0xb08] sm:$0xff]
    %v379 = vld [vmem:[#allocation2 + $0xb10] sm:$0xff]
    %v380 = vld [vmem:[#allocation2 + $0xb18] sm:$0xff]
    %v381 = vld [vmem:[#allocation2 + $0xb20] sm:$0xff]
    %v382 = vld [vmem:[#allocation2 + $0xb28] sm:$0xff]
    %v383 = vld [vmem:[#allocation2 + $0xb30] sm:$0xff]
    %v384 = vld [vmem:[#allocation2 + $0xb38] sm:$0xff]
    %v385 = vld [vmem:[#allocation2 + $0xb40] sm:$0xff]
    %v386 = vld [vmem:[#allocation2 + $0xb48] sm:$0xff]
    %v387 = vld [vmem:[#allocation2 + $0xb50] sm:$0xff]
    %v388 = vld [vmem:[#allocation2 + $0xb58] sm:$0xff]
    %v389 = vld [vmem:[#allocation2 + $0xb60] sm:$0xff]
    %v390 = vld [vmem:[#allocation2 + $0xb68] sm:$0xff]
    %v391 = vld [vmem:[#allocation2 + $0xb70] sm:$0xff]
    %v392 = vld [vmem:[#allocation2 + $0xb78] sm:$0xff]
    %v393 = vld [vmem:[#allocation2 + $0xb80] sm:$0xff]
    %v394 = vld [vmem:[#allocation2 + $0xb88] sm:$0xff]
    %v395 = vld [vmem:[#allocation2 + $0xb90] sm:$0xff]
    %v396 = vld [vmem:[#allocation2 + $0xb98] sm:$0xff]
    %v397 = vld [vmem:[#allocation2 + $0xba0] sm:$0xff]
    %v398 = vld [vmem:[#allocation2 + $0xba8] sm:$0xff]
    %v399 = vld [vmem:[#allocation2 + $0xbb0] sm:$0xff]
    %v400 = vld [vmem:[#allocation2 + $0xbb8] sm:$0xff]
    %v401 = vld [vmem:[#allocation2 + $0xbc0] sm:$0xff]
    %v402 = vld [vmem:[#allocation2 + $0xbc8] sm:$0xff]
    %v403 = vld [vmem:[#allocation2 + $0xbd0] sm:$0xff]
    %v404 = vld [vmem:[#allocation2 + $0xbd8] sm:$0xff]
    %v405 = vld [vmem:[#allocation2 + $0xbe0] sm:$0xff]
    %v406 = vld [vmem:[#allocation2 + $0xbe8] sm:$0xff]
    %v407 = vld [vmem:[#allocation2 + $0xbf0] sm:$0xff]
    %v408 = vld [vmem:[#allocation2 + $0xbf8] sm:$0xff]
    %v409 = vld [vmem:[#allocation2 + $0xc00] sm:$0xff]
    %v410 = vld [vmem:[#allocation2 + $0xc08] sm:$0xff]
    %v411 = vld [vmem:[#allocation2 + $0xc10] sm:$0xff]
    %v412 = vld [vmem:[#allocation2 + $0xc18] sm:$0xff]
    %v413 = vld [vmem:[#allocation2 + $0xc20] sm:$0xff]
    %v414 = vld [vmem:[#allocation2 + $0xc28] sm:$0xff]
    %v415 = vld [vmem:[#allocation2 + $0xc30] sm:$0xff]
    %v416 = vld [vmem:[#allocation2 + $0xc38] sm:$0xff]
    %v417 = vld [vmem:[#allocation2 + $0xc40] sm:$0xff]
    %v418 = vld [vmem:[#allocation2 + $0xc48] sm:$0xff]
    %v419 = vld [vmem:[#allocation2 + $0xc50] sm:$0xff]
    %v420 = vld [vmem:[#allocation2 + $0xc58] sm:$0xff]
    %v421 = vld [vmem:[#allocation2 + $0xc60] sm:$0xff]
    %v422 = vld [vmem:[#allocation2 + $0xc68] sm:$0xff]
    %v423 = vld [vmem:[#allocation2 + $0xc70] sm:$0xff]
    %v424 = vld [vmem:[#allocation2 + $0xc78] sm:$0xff]
    %v425 = vld [vmem:[#allocation2 + $0xc80] sm:$0xff]
    %v426 = vld [vmem:[#allocation2 + $0xc88] sm:$0xff]
    %v427 = vld [vmem:[#allocation2 + $0xc90] sm:$0xff]
    %v428 = vld [vmem:[#allocation2 + $0xc98] sm:$0xff]
    %v429 = vld [vmem:[#allocation2 + $0xca0] sm:$0xff]
    %v430 = vld [vmem:[#allocation2 + $0xca8] sm:$0xff]
    %v431 = vld [vmem:[#allocation2 + $0xcb0] sm:$0xff]
    %v432 = vld [vmem:[#allocation2 + $0xcb8] sm:$0xff]
    %v433 = vld [vmem:[#allocation2 + $0xcc0] sm:$0xff]
    %v434 = vld [vmem:[#allocation2 + $0xcc8] sm:$0xff]
    %v435 = vld [vmem:[#allocation2 + $0xcd0] sm:$0xff]
    %v436 = vld [vmem:[#allocation2 + $0xcd8] sm:$0xff]
    %v437 = vld [vmem:[#allocation2 + $0xce0] sm:$0xff]
    %v438 = vld [vmem:[#allocation2 + $0xce8] sm:$0xff]
    %v439 = vld [vmem:[#allocation2 + $0xcf0] sm:$0xff]
    %v440 = vld [vmem:[#allocation2 + $0xcf8] sm:$0xff]
    %v441 = vld [vmem:[#allocation2 + $0xd00] sm:$0xff]
    %v442 = vld [vmem:[#allocation2 + $0xd08] sm:$0xff]
    %v443 = vld [vmem:[#allocation2 + $0xd10] sm:$0xff]
    %v444 = vld [vmem:[#allocation2 + $0xd18] sm:$0xff]
    %v445 = vld [vmem:[#allocation2 + $0xd20] sm:$0xff]
    %v446 = vld [vmem:[#allocation2 + $0xd28] sm:$0xff]
    %v447 = vld [vmem:[#allocation2 + $0xd30] sm:$0xff]
    %v448 = vld [vmem:[#allocation2 + $0xd38] sm:$0xff]
    %v449 = vld [vmem:[#allocation2 + $0xd40] sm:$0xff]
    %v450 = vld [vmem:[#allocation2 + $0xd48] sm:$0xff]
    %v451 = vld [vmem:[#allocation2 + $0xd50] sm:$0xff]
    %v452 = vld [vmem:[#allocation2 + $0xd58] sm:$0xff]
    %v453 = vld [vmem:[#allocation2 + $0xd60] sm:$0xff]
    %v454 = vld [vmem:[#allocation2 + $0xd68] sm:$0xff]
    %v455 = vld [vmem:[#allocation2 + $0xd70] sm:$0xff]
    %v456 = vld [vmem:[#allocation2 + $0xd78] sm:$0xff]
    %v457 = vld [vmem:[#allocation2 + $0xd80] sm:$0xff]
    %v458 = vld [vmem:[#allocation2 + $0xd88] sm:$0xff]
    %v459 = vld [vmem:[#allocation2 + $0xd90] sm:$0xff]
    %v460 = vld [vmem:[#allocation2 + $0xd98] sm:$0xff]
    %v461 = vld [vmem:[#allocation2 + $0xda0] sm:$0xff]
    %v462 = vld [vmem:[#allocation2 + $0xda8] sm:$0xff]
    %v463 = vld [vmem:[#allocation2 + $0xdb0] sm:$0xff]
    %v464 = vld [vmem:[#allocation2 + $0xdb8] sm:$0xff]
    %v465 = vld [vmem:[#allocation2 + $0xdc0] sm:$0xff]
    %v466 = vld [vmem:[#allocation2 + $0xdc8] sm:$0xff]
    %v467 = vld [vmem:[#allocation2 + $0xdd0] sm:$0xff]
    %v468 = vld [vmem:[#allocation2 + $0xdd8] sm:$0xff]
    %v469 = vld [vmem:[#allocation2 + $0xde0] sm:$0xff]
    %v470 = vld [vmem:[#allocation2 + $0xde8] sm:$0xff]
    %v471 = vld [vmem:[#allocation2 + $0xdf0] sm:$0xff]
    %v472 = vld [vmem:[#allocation2 + $0xdf8] sm:$0xff]
    %v473 = vld [vmem:[#allocation2 + $0xe00] sm:$0xff]
    %v474 = vld [vmem:[#allocation2 + $0xe08] sm:$0xff]
    %v475 = vld [vmem:[#allocation2 + $0xe10] sm:$0xff]
    %v476 = vld [vmem:[#allocation2 + $0xe18] sm:$0xff]
    %v477 = vld [vmem:[#allocation2 + $0xe20] sm:$0xff]
    %v478 = vld [vmem:[#allocation2 + $0xe28] sm:$0xff]
    %v479 = vld [vmem:[#allocation2 + $0xe30] sm:$0xff]
    %v480 = vld [vmem:[#allocation2 + $0xe38] sm:$0xff]
    %v481 = vld [vmem:[#allocation2 + $0xe40] sm:$0xff]
    %v482 = vld [vmem:[#allocation2 + $0xe48] sm:$0xff]
    %v483 = vld [vmem:[#allocation2 + $0xe50] sm:$0xff]
    %v484 = vld [vmem:[#allocation2 + $0xe58] sm:$0xff]
    %v485 = vld [vmem:[#allocation2 + $0xe60] sm:$0xff]
    %v486 = vld [vmem:[#allocation2 + $0xe68] sm:$0xff]
    %v487 = vld [vmem:[#allocation2 + $0xe70] sm:$0xff]
    %v488 = vld [vmem:[#allocation2 + $0xe78] sm:$0xff]
    %v489 = vld [vmem:[#allocation2 + $0xe80] sm:$0xff]
    %v490 = vld [vmem:[#allocation2 + $0xe88] sm:$0xff]
    %v491 = vld [vmem:[#allocation2 + $0xe90] sm:$0xff]
    %v492 = vld [vmem:[#allocation2 + $0xe98] sm:$0xff]
    %v493 = vld [vmem:[#allocation2 + $0xea0] sm:$0xff]
    %v494 = vld [vmem:[#allocation2 + $0xea8] sm:$0xff]
    %v495 = vld [vmem:[#allocation2 + $0xeb0] sm:$0xff]
    %v496 = vld [vmem:[#allocation2 + $0xeb8] sm:$0xff]
    %v497 = vld [vmem:[#allocation2 + $0xec0] sm:$0xff]
    %v498 = vld [vmem:[#allocation2 + $0xec8] sm:$0xff]
    %v499 = vld [vmem:[#allocation2 + $0xed0] sm:$0xff]
    %v500 = vld [vmem:[#allocation2 + $0xed8] sm:$0xff]
    %v501 = vld [vmem:[#allocation2 + $0xee0] sm:$0xff]
    %v502 = vld [vmem:[#allocation2 + $0xee8] sm:$0xff]
    %v503 = vld [vmem:[#allocation2 + $0xef0] sm:$0xff]
    %v504 = vld [vmem:[#allocation2 + $0xef8] sm:$0xff]
    %v505 = vld [vmem:[#allocation2 + $0xf00] sm:$0xff]
    %v506 = vld [vmem:[#allocation2 + $0xf08] sm:$0xff]
    %v507 = vld [vmem:[#allocation2 + $0xf10] sm:$0xff]
    %v508 = vld [vmem:[#allocation2 + $0xf18] sm:$0xff]
    %v509 = vld [vmem:[#allocation2 + $0xf20] sm:$0xff]
    %v510 = vld [vmem:[#allocation2 + $0xf28] sm:$0xff]
    %v511 = vld [vmem:[#allocation2 + $0xf30] sm:$0xff]
    %v512 = vld [vmem:[#allocation2 + $0xf38] sm:$0xff]
    %v513 = vld [vmem:[#allocation2 + $0xf40] sm:$0xff]
    %v514 = vld [vmem:[#allocation2 + $0xf48] sm:$0xff]
    %v515 = vld [vmem:[#allocation2 + $0xf50] sm:$0xff]
    %v516 = vld [vmem:[#allocation2 + $0xf58] sm:$0xff]
    %v517 = vld [vmem:[#allocation2 + $0xf60] sm:$0xff]
    %v518 = vld [vmem:[#allocation2 + $0xf68] sm:$0xff]
    %v519 = vld [vmem:[#allocation2 + $0xf70] sm:$0xff]
    %v520 = vld [vmem:[#allocation2 + $0xf78] sm:$0xff]
    %v521 = vld [vmem:[#allocation2 + $0xf80] sm:$0xff]
    %v522 = vld [vmem:[#allocation2 + $0xf88] sm:$0xff]
    %v523 = vld [vmem:[#allocation2 + $0xf90] sm:$0xff]
    %v524 = vld [vmem:[#allocation2 + $0xf98] sm:$0xff]
    %v525 = vld [vmem:[#allocation2 + $0xfa0] sm:$0xff]
    %v526 = vld [vmem:[#allocation2 + $0xfa8] sm:$0xff]
    %v527 = vld [vmem:[#allocation2 + $0xfb0] sm:$0xff]
    %v528 = vld [vmem:[#allocation2 + $0xfb8] sm:$0xff]
    %v529 = vld [vmem:[#allocation2 + $0xfc0] sm:$0xff]
    %v530 = vld [vmem:[#allocation2 + $0xfc8] sm:$0xff]
    %v531 = vld [vmem:[#allocation2 + $0xfd0] sm:$0xff]
    %v532 = vld [vmem:[#allocation2 + $0xfd8] sm:$0xff]
    %v533 = vld [vmem:[#allocation2 + $0xfe0] sm:$0xff]
    %v534 = vld [vmem:[#allocation2 + $0xfe8] sm:$0xff]
    %v535 = vld [vmem:[#allocation2 + $0xff0] sm:$0xff]
    %v536 = vld [vmem:[#allocation2 + $0xff8] sm:$0xff]
    %vm537 = vcmp.ge.f32.partialorder %v25, 0.0
    %vm538 = vcmp.ge.f32.partialorder %v26, 0.0
    %vm539 = vcmp.ge.f32.partialorder %v27, 0.0
    %vm540 = vcmp.ge.f32.partialorder %v28, 0.0
    %vm541 = vcmp.ge.f32.partialorder %v29, 0.0
    %vm542 = vcmp.ge.f32.partialorder %v30, 0.0
    %vm543 = vcmp.ge.f32.partialorder %v31, 0.0
    %vm544 = vcmp.ge.f32.partialorder %v32, 0.0
    %vm545 = vcmp.ge.f32.partialorder %v33, 0.0
    %vm546 = vcmp.ge.f32.partialorder %v34, 0.0
    %vm547 = vcmp.ge.f32.partialorder %v35, 0.0
    %vm548 = vcmp.ge.f32.partialorder %v36, 0.0
    %vm549 = vcmp.ge.f32.partialorder %v37, 0.0
    %vm550 = vcmp.ge.f32.partialorder %v38, 0.0
    %vm551 = vcmp.ge.f32.partialorder %v39, 0.0
    %vm552 = vcmp.ge.f32.partialorder %v40, 0.0
    %vm553 = vcmp.ge.f32.partialorder %v41, 0.0
    %vm554 = vcmp.ge.f32.partialorder %v42, 0.0
    %vm555 = vcmp.ge.f32.partialorder %v43, 0.0
    %vm556 = vcmp.ge.f32.partialorder %v44, 0.0
    %vm557 = vcmp.ge.f32.partialorder %v45, 0.0
    %vm558 = vcmp.ge.f32.partialorder %v46, 0.0
    %vm559 = vcmp.ge.f32.partialorder %v47, 0.0
    %vm560 = vcmp.ge.f32.partialorder %v48, 0.0
    %vm561 = vcmp.ge.f32.partialorder %v49, 0.0
    %vm562 = vcmp.ge.f32.partialorder %v50, 0.0
    %vm563 = vcmp.ge.f32.partialorder %v51, 0.0
    %vm564 = vcmp.ge.f32.partialorder %v52, 0.0
    %vm565 = vcmp.ge.f32.partialorder %v53, 0.0
    %vm566 = vcmp.ge.f32.partialorder %v54, 0.0
    %vm567 = vcmp.ge.f32.partialorder %v55, 0.0
    %vm568 = vcmp.ge.f32.partialorder %v56, 0.0
    %vm569 = vcmp.ge.f32.partialorder %v57, 0.0
    %vm570 = vcmp.ge.f32.partialorder %v58, 0.0
    %vm571 = vcmp.ge.f32.partialorder %v59, 0.0
    %vm572 = vcmp.ge.f32.partialorder %v60, 0.0
    %vm573 = vcmp.ge.f32.partialorder %v61, 0.0
    %vm574 = vcmp.ge.f32.partialorder %v62, 0.0
    %vm575 = vcmp.ge.f32.partialorder %v63, 0.0
    %vm576 = vcmp.ge.f32.partialorder %v64, 0.0
    %vm577 = vcmp.ge.f32.partialorder %v65, 0.0
    %vm578 = vcmp.ge.f32.partialorder %v66, 0.0
    %vm579 = vcmp.ge.f32.partialorder %v67, 0.0
    %vm580 = vcmp.ge.f32.partialorder %v68, 0.0
    %vm581 = vcmp.ge.f32.partialorder %v69, 0.0
    %vm582 = vcmp.ge.f32.partialorder %v70, 0.0
    %vm583 = vcmp.ge.f32.partialorder %v71, 0.0
    %vm584 = vcmp.ge.f32.partialorder %v72, 0.0
    %vm585 = vcmp.ge.f32.partialorder %v73, 0.0
    %vm586 = vcmp.ge.f32.partialorder %v74, 0.0
    %vm587 = vcmp.ge.f32.partialorder %v75, 0.0
    %vm588 = vcmp.ge.f32.partialorder %v76, 0.0
    %vm589 = vcmp.ge.f32.partialorder %v77, 0.0
    %vm590 = vcmp.ge.f32.partialorder %v78, 0.0
    %vm591 = vcmp.ge.f32.partialorder %v79, 0.0
    %vm592 = vcmp.ge.f32.partialorder %v80, 0.0
    %vm593 = vcmp.ge.f32.partialorder %v81, 0.0
    %vm594 = vcmp.ge.f32.partialorder %v82, 0.0
    %vm595 = vcmp.ge.f32.partialorder %v83, 0.0
    %vm596 = vcmp.ge.f32.partialorder %v84, 0.0
    %vm597 = vcmp.ge.f32.partialorder %v85, 0.0
    %vm598 = vcmp.ge.f32.partialorder %v86, 0.0
    %vm599 = vcmp.ge.f32.partialorder %v87, 0.0
    %vm600 = vcmp.ge.f32.partialorder %v88, 0.0
    %vm601 = vcmp.ge.f32.partialorder %v89, 0.0
    %vm602 = vcmp.ge.f32.partialorder %v90, 0.0
    %vm603 = vcmp.ge.f32.partialorder %v91, 0.0
    %vm604 = vcmp.ge.f32.partialorder %v92, 0.0
    %vm605 = vcmp.ge.f32.partialorder %v93, 0.0
    %vm606 = vcmp.ge.f32.partialorder %v94, 0.0
    %vm607 = vcmp.ge.f32.partialorder %v95, 0.0
    %vm608 = vcmp.ge.f32.partialorder %v96, 0.0
    %vm609 = vcmp.ge.f32.partialorder %v97, 0.0
    %vm610 = vcmp.ge.f32.partialorder %v98, 0.0
    %vm611 = vcmp.ge.f32.partialorder %v99, 0.0
    %vm612 = vcmp.ge.f32.partialorder %v100, 0.0
    %vm613 = vcmp.ge.f32.partialorder %v101, 0.0
    %vm614 = vcmp.ge.f32.partialorder %v102, 0.0
    %vm615 = vcmp.ge.f32.partialorder %v103, 0.0
    %vm616 = vcmp.ge.f32.partialorder %v104, 0.0
    %vm617 = vcmp.ge.f32.partialorder %v105, 0.0
    %vm618 = vcmp.ge.f32.partialorder %v106, 0.0
    %vm619 = vcmp.ge.f32.partialorder %v107, 0.0
    %vm620 = vcmp.ge.f32.partialorder %v108, 0.0
    %vm621 = vcmp.ge.f32.partialorder %v109, 0.0
    %vm622 = vcmp.ge.f32.partialorder %v110, 0.0
    %vm623 = vcmp.ge.f32.partialorder %v111, 0.0
    %vm624 = vcmp.ge.f32.partialorder %v112, 0.0
    %vm625 = vcmp.ge.f32.partialorder %v113, 0.0
    %vm626 = vcmp.ge.f32.partialorder %v114, 0.0
    %vm627 = vcmp.ge.f32.partialorder %v115, 0.0
    %vm628 = vcmp.ge.f32.partialorder %v116, 0.0
    %vm629 = vcmp.ge.f32.partialorder %v117, 0.0
    %vm630 = vcmp.ge.f32.partialorder %v118, 0.0
    %vm631 = vcmp.ge.f32.partialorder %v119, 0.0
    %vm632 = vcmp.ge.f32.partialorder %v120, 0.0
    %vm633 = vcmp.ge.f32.partialorder %v121, 0.0
    %vm634 = vcmp.ge.f32.partialorder %v122, 0.0
    %vm635 = vcmp.ge.f32.partialorder %v123, 0.0
    %vm636 = vcmp.ge.f32.partialorder %v124, 0.0
    %vm637 = vcmp.ge.f32.partialorder %v125, 0.0
    %vm638 = vcmp.ge.f32.partialorder %v126, 0.0
    %vm639 = vcmp.ge.f32.partialorder %v127, 0.0
    %vm640 = vcmp.ge.f32.partialorder %v128, 0.0
    %vm641 = vcmp.ge.f32.partialorder %v129, 0.0
    %vm642 = vcmp.ge.f32.partialorder %v130, 0.0
    %vm643 = vcmp.ge.f32.partialorder %v131, 0.0
    %vm644 = vcmp.ge.f32.partialorder %v132, 0.0
    %vm645 = vcmp.ge.f32.partialorder %v133, 0.0
    %vm646 = vcmp.ge.f32.partialorder %v134, 0.0
    %vm647 = vcmp.ge.f32.partialorder %v135, 0.0
    %vm648 = vcmp.ge.f32.partialorder %v136, 0.0
    %vm649 = vcmp.ge.f32.partialorder %v137, 0.0
    %vm650 = vcmp.ge.f32.partialorder %v138, 0.0
    %vm651 = vcmp.ge.f32.partialorder %v139, 0.0
    %vm652 = vcmp.ge.f32.partialorder %v140, 0.0
    %vm653 = vcmp.ge.f32.partialorder %v141, 0.0
    %vm654 = vcmp.ge.f32.partialorder %v142, 0.0
    %vm655 = vcmp.ge.f32.partialorder %v143, 0.0
    %vm656 = vcmp.ge.f32.partialorder %v144, 0.0
    %vm657 = vcmp.ge.f32.partialorder %v145, 0.0
    %vm658 = vcmp.ge.f32.partialorder %v146, 0.0
    %vm659 = vcmp.ge.f32.partialorder %v147, 0.0
    %vm660 = vcmp.ge.f32.partialorder %v148, 0.0
    %vm661 = vcmp.ge.f32.partialorder %v149, 0.0
    %vm662 = vcmp.ge.f32.partialorder %v150, 0.0
    %vm663 = vcmp.ge.f32.partialorder %v151, 0.0
    %vm664 = vcmp.ge.f32.partialorder %v152, 0.0
    %vm665 = vcmp.ge.f32.partialorder %v153, 0.0
    %vm666 = vcmp.ge.f32.partialorder %v154, 0.0
    %vm667 = vcmp.ge.f32.partialorder %v155, 0.0
    %vm668 = vcmp.ge.f32.partialorder %v156, 0.0
    %vm669 = vcmp.ge.f32.partialorder %v157, 0.0
    %vm670 = vcmp.ge.f32.partialorder %v158, 0.0
    %vm671 = vcmp.ge.f32.partialorder %v159, 0.0
    %vm672 = vcmp.ge.f32.partialorder %v160, 0.0
    %vm673 = vcmp.ge.f32.partialorder %v161, 0.0
    %vm674 = vcmp.ge.f32.partialorder %v162, 0.0
    %vm675 = vcmp.ge.f32.partialorder %v163, 0.0
    %vm676 = vcmp.ge.f32.partialorder %v164, 0.0
    %vm677 = vcmp.ge.f32.partialorder %v165, 0.0
    %vm678 = vcmp.ge.f32.partialorder %v166, 0.0
    %vm679 = vcmp.ge.f32.partialorder %v167, 0.0
    %vm680 = vcmp.ge.f32.partialorder %v168, 0.0
    %vm681 = vcmp.ge.f32.partialorder %v169, 0.0
    %vm682 = vcmp.ge.f32.partialorder %v170, 0.0
    %vm683 = vcmp.ge.f32.partialorder %v171, 0.0
    %vm684 = vcmp.ge.f32.partialorder %v172, 0.0
    %vm685 = vcmp.ge.f32.partialorder %v173, 0.0
    %vm686 = vcmp.ge.f32.partialorder %v174, 0.0
    %vm687 = vcmp.ge.f32.partialorder %v175, 0.0
    %vm688 = vcmp.ge.f32.partialorder %v176, 0.0
    %vm689 = vcmp.ge.f32.partialorder %v177, 0.0
    %vm690 = vcmp.ge.f32.partialorder %v178, 0.0
    %vm691 = vcmp.ge.f32.partialorder %v179, 0.0
    %vm692 = vcmp.ge.f32.partialorder %v180, 0.0
    %vm693 = vcmp.ge.f32.partialorder %v181, 0.0
    %vm694 = vcmp.ge.f32.partialorder %v182, 0.0
    %vm695 = vcmp.ge.f32.partialorder %v183, 0.0
    %vm696 = vcmp.ge.f32.partialorder %v184, 0.0
    %vm697 = vcmp.ge.f32.partialorder %v185, 0.0
    %vm698 = vcmp.ge.f32.partialorder %v186, 0.0
    %vm699 = vcmp.ge.f32.partialorder %v187, 0.0
    %vm700 = vcmp.ge.f32.partialorder %v188, 0.0
    %vm701 = vcmp.ge.f32.partialorder %v189, 0.0
    %vm702 = vcmp.ge.f32.partialorder %v190, 0.0
    %vm703 = vcmp.ge.f32.partialorder %v191, 0.0
    %vm704 = vcmp.ge.f32.partialorder %v192, 0.0
    %vm705 = vcmp.ge.f32.partialorder %v193, 0.0
    %vm706 = vcmp.ge.f32.partialorder %v194, 0.0
    %vm707 = vcmp.ge.f32.partialorder %v195, 0.0
    %vm708 = vcmp.ge.f32.partialorder %v196, 0.0
    %vm709 = vcmp.ge.f32.partialorder %v197, 0.0
    %vm710 = vcmp.ge.f32.partialorder %v198, 0.0
    %vm711 = vcmp.ge.f32.partialorder %v199, 0.0
    %vm712 = vcmp.ge.f32.partialorder %v200, 0.0
    %vm713 = vcmp.ge.f32.partialorder %v201, 0.0
    %vm714 = vcmp.ge.f32.partialorder %v202, 0.0
    %vm715 = vcmp.ge.f32.partialorder %v203, 0.0
    %vm716 = vcmp.ge.f32.partialorder %v204, 0.0
    %vm717 = vcmp.ge.f32.partialorder %v205, 0.0
    %vm718 = vcmp.ge.f32.partialorder %v206, 0.0
    %vm719 = vcmp.ge.f32.partialorder %v207, 0.0
    %vm720 = vcmp.ge.f32.partialorder %v208, 0.0
    %vm721 = vcmp.ge.f32.partialorder %v209, 0.0
    %vm722 = vcmp.ge.f32.partialorder %v210, 0.0
    %vm723 = vcmp.ge.f32.partialorder %v211, 0.0
    %vm724 = vcmp.ge.f32.partialorder %v212, 0.0
    %vm725 = vcmp.ge.f32.partialorder %v213, 0.0
    %vm726 = vcmp.ge.f32.partialorder %v214, 0.0
    %vm727 = vcmp.ge.f32.partialorder %v215, 0.0
    %vm728 = vcmp.ge.f32.partialorder %v216, 0.0
    %vm729 = vcmp.ge.f32.partialorder %v217, 0.0
    %vm730 = vcmp.ge.f32.partialorder %v218, 0.0
    %vm731 = vcmp.ge.f32.partialorder %v219, 0.0
    %vm732 = vcmp.ge.f32.partialorder %v220, 0.0
    %vm733 = vcmp.ge.f32.partialorder %v221, 0.0
    %vm734 = vcmp.ge.f32.partialorder %v222, 0.0
    %vm735 = vcmp.ge.f32.partialorder %v223, 0.0
    %vm736 = vcmp.ge.f32.partialorder %v224, 0.0
    %vm737 = vcmp.ge.f32.partialorder %v225, 0.0
    %vm738 = vcmp.ge.f32.partialorder %v226, 0.0
    %vm739 = vcmp.ge.f32.partialorder %v227, 0.0
    %vm740 = vcmp.ge.f32.partialorder %v228, 0.0
    %vm741 = vcmp.ge.f32.partialorder %v229, 0.0
    %vm742 = vcmp.ge.f32.partialorder %v230, 0.0
    %vm743 = vcmp.ge.f32.partialorder %v231, 0.0
    %vm744 = vcmp.ge.f32.partialorder %v232, 0.0
    %vm745 = vcmp.ge.f32.partialorder %v233, 0.0
    %vm746 = vcmp.ge.f32.partialorder %v234, 0.0
    %vm747 = vcmp.ge.f32.partialorder %v235, 0.0
    %vm748 = vcmp.ge.f32.partialorder %v236, 0.0
    %vm749 = vcmp.ge.f32.partialorder %v237, 0.0
    %vm750 = vcmp.ge.f32.partialorder %v238, 0.0
    %vm751 = vcmp.ge.f32.partialorder %v239, 0.0
    %vm752 = vcmp.ge.f32.partialorder %v240, 0.0
    %vm753 = vcmp.ge.f32.partialorder %v241, 0.0
    %vm754 = vcmp.ge.f32.partialorder %v242, 0.0
    %vm755 = vcmp.ge.f32.partialorder %v243, 0.0
    %vm756 = vcmp.ge.f32.partialorder %v244, 0.0
    %vm757 = vcmp.ge.f32.partialorder %v245, 0.0
    %vm758 = vcmp.ge.f32.partialorder %v246, 0.0
    %vm759 = vcmp.ge.f32.partialorder %v247, 0.0
    %vm760 = vcmp.ge.f32.partialorder %v248, 0.0
    %vm761 = vcmp.ge.f32.partialorder %v249, 0.0
    %vm762 = vcmp.ge.f32.partialorder %v250, 0.0
    %vm763 = vcmp.ge.f32.partialorder %v251, 0.0
    %vm764 = vcmp.ge.f32.partialorder %v252, 0.0
    %vm765 = vcmp.ge.f32.partialorder %v253, 0.0
    %vm766 = vcmp.ge.f32.partialorder %v254, 0.0
    %vm767 = vcmp.ge.f32.partialorder %v255, 0.0
    %vm768 = vcmp.ge.f32.partialorder %v256, 0.0
    %vm769 = vcmp.ge.f32.partialorder %v257, 0.0
    %vm770 = vcmp.ge.f32.partialorder %v258, 0.0
    %vm771 = vcmp.ge.f32.partialorder %v259, 0.0
    %vm772 = vcmp.ge.f32.partialorder %v260, 0.0
    %vm773 = vcmp.ge.f32.partialorder %v261, 0.0
    %vm774 = vcmp.ge.f32.partialorder %v262, 0.0
    %vm775 = vcmp.ge.f32.partialorder %v263, 0.0
    %vm776 = vcmp.ge.f32.partialorder %v264, 0.0
    %vm777 = vcmp.ge.f32.partialorder %v265, 0.0
    %vm778 = vcmp.ge.f32.partialorder %v266, 0.0
    %vm779 = vcmp.ge.f32.partialorder %v267, 0.0
    %vm780 = vcmp.ge.f32.partialorder %v268, 0.0
    %vm781 = vcmp.ge.f32.partialorder %v269, 0.0
    %vm782 = vcmp.ge.f32.partialorder %v270, 0.0
    %vm783 = vcmp.ge.f32.partialorder %v271, 0.0
    %vm784 = vcmp.ge.f32.partialorder %v272, 0.0
    %vm785 = vcmp.ge.f32.partialorder %v273, 0.0
    %vm786 = vcmp.ge.f32.partialorder %v274, 0.0
    %vm787 = vcmp.ge.f32.partialorder %v275, 0.0
    %vm788 = vcmp.ge.f32.partialorder %v276, 0.0
    %vm789 = vcmp.ge.f32.partialorder %v277, 0.0
    %vm790 = vcmp.ge.f32.partialorder %v278, 0.0
    %vm791 = vcmp.ge.f32.partialorder %v279, 0.0
    %vm792 = vcmp.ge.f32.partialorder %v280, 0.0
    %vm793 = vcmp.ge.f32.partialorder %v281, 0.0
    %vm794 = vcmp.ge.f32.partialorder %v282, 0.0
    %vm795 = vcmp.ge.f32.partialorder %v283, 0.0
    %vm796 = vcmp.ge.f32.partialorder %v284, 0.0
    %vm797 = vcmp.ge.f32.partialorder %v285, 0.0
    %vm798 = vcmp.ge.f32.partialorder %v286, 0.0
    %vm799 = vcmp.ge.f32.partialorder %v287, 0.0
    %vm800 = vcmp.ge.f32.partialorder %v288, 0.0
    %vm801 = vcmp.ge.f32.partialorder %v289, 0.0
    %vm802 = vcmp.ge.f32.partialorder %v290, 0.0
    %vm803 = vcmp.ge.f32.partialorder %v291, 0.0
    %vm804 = vcmp.ge.f32.partialorder %v292, 0.0
    %vm805 = vcmp.ge.f32.partialorder %v293, 0.0
    %vm806 = vcmp.ge.f32.partialorder %v294, 0.0
    %vm807 = vcmp.ge.f32.partialorder %v295, 0.0
    %vm808 = vcmp.ge.f32.partialorder %v296, 0.0
    %vm809 = vcmp.ge.f32.partialorder %v297, 0.0
    %vm810 = vcmp.ge.f32.partialorder %v298, 0.0
    %vm811 = vcmp.ge.f32.partialorder %v299, 0.0
    %vm812 = vcmp.ge.f32.partialorder %v300, 0.0
    %vm813 = vcmp.ge.f32.partialorder %v301, 0.0
    %vm814 = vcmp.ge.f32.partialorder %v302, 0.0
    %vm815 = vcmp.ge.f32.partialorder %v303, 0.0
    %vm816 = vcmp.ge.f32.partialorder %v304, 0.0
    %vm817 = vcmp.ge.f32.partialorder %v305, 0.0
    %vm818 = vcmp.ge.f32.partialorder %v306, 0.0
    %vm819 = vcmp.ge.f32.partialorder %v307, 0.0
    %vm820 = vcmp.ge.f32.partialorder %v308, 0.0
    %vm821 = vcmp.ge.f32.partialorder %v309, 0.0
    %vm822 = vcmp.ge.f32.partialorder %v310, 0.0
    %vm823 = vcmp.ge.f32.partialorder %v311, 0.0
    %vm824 = vcmp.ge.f32.partialorder %v312, 0.0
    %vm825 = vcmp.ge.f32.partialorder %v313, 0.0
    %vm826 = vcmp.ge.f32.partialorder %v314, 0.0
    %vm827 = vcmp.ge.f32.partialorder %v315, 0.0
    %vm828 = vcmp.ge.f32.partialorder %v316, 0.0
    %vm829 = vcmp.ge.f32.partialorder %v317, 0.0
    %vm830 = vcmp.ge.f32.partialorder %v318, 0.0
    %vm831 = vcmp.ge.f32.partialorder %v319, 0.0
    %vm832 = vcmp.ge.f32.partialorder %v320, 0.0
    %vm833 = vcmp.ge.f32.partialorder %v321, 0.0
    %vm834 = vcmp.ge.f32.partialorder %v322, 0.0
    %vm835 = vcmp.ge.f32.partialorder %v323, 0.0
    %vm836 = vcmp.ge.f32.partialorder %v324, 0.0
    %vm837 = vcmp.ge.f32.partialorder %v325, 0.0
    %vm838 = vcmp.ge.f32.partialorder %v326, 0.0
    %vm839 = vcmp.ge.f32.partialorder %v327, 0.0
    %vm840 = vcmp.ge.f32.partialorder %v328, 0.0
    %vm841 = vcmp.ge.f32.partialorder %v329, 0.0
    %vm842 = vcmp.ge.f32.partialorder %v330, 0.0
    %vm843 = vcmp.ge.f32.partialorder %v331, 0.0
    %vm844 = vcmp.ge.f32.partialorder %v332, 0.0
    %vm845 = vcmp.ge.f32.partialorder %v333, 0.0
    %vm846 = vcmp.ge.f32.partialorder %v334, 0.0
    %vm847 = vcmp.ge.f32.partialorder %v335, 0.0
    %vm848 = vcmp.ge.f32.partialorder %v336, 0.0
    %vm849 = vcmp.ge.f32.partialorder %v337, 0.0
    %vm850 = vcmp.ge.f32.partialorder %v338, 0.0
    %vm851 = vcmp.ge.f32.partialorder %v339, 0.0
    %vm852 = vcmp.ge.f32.partialorder %v340, 0.0
    %vm853 = vcmp.ge.f32.partialorder %v341, 0.0
    %vm854 = vcmp.ge.f32.partialorder %v342, 0.0
    %vm855 = vcmp.ge.f32.partialorder %v343, 0.0
    %vm856 = vcmp.ge.f32.partialorder %v344, 0.0
    %vm857 = vcmp.ge.f32.partialorder %v345, 0.0
    %vm858 = vcmp.ge.f32.partialorder %v346, 0.0
    %vm859 = vcmp.ge.f32.partialorder %v347, 0.0
    %vm860 = vcmp.ge.f32.partialorder %v348, 0.0
    %vm861 = vcmp.ge.f32.partialorder %v349, 0.0
    %vm862 = vcmp.ge.f32.partialorder %v350, 0.0
    %vm863 = vcmp.ge.f32.partialorder %v351, 0.0
    %vm864 = vcmp.ge.f32.partialorder %v352, 0.0
    %vm865 = vcmp.ge.f32.partialorder %v353, 0.0
    %vm866 = vcmp.ge.f32.partialorder %v354, 0.0
    %vm867 = vcmp.ge.f32.partialorder %v355, 0.0
    %vm868 = vcmp.ge.f32.partialorder %v356, 0.0
    %vm869 = vcmp.ge.f32.partialorder %v357, 0.0
    %vm870 = vcmp.ge.f32.partialorder %v358, 0.0
    %vm871 = vcmp.ge.f32.partialorder %v359, 0.0
    %vm872 = vcmp.ge.f32.partialorder %v360, 0.0
    %vm873 = vcmp.ge.f32.partialorder %v361, 0.0
    %vm874 = vcmp.ge.f32.partialorder %v362, 0.0
    %vm875 = vcmp.ge.f32.partialorder %v363, 0.0
    %vm876 = vcmp.ge.f32.partialorder %v364, 0.0
    %vm877 = vcmp.ge.f32.partialorder %v365, 0.0
    %vm878 = vcmp.ge.f32.partialorder %v366, 0.0
    %vm879 = vcmp.ge.f32.partialorder %v367, 0.0
    %vm880 = vcmp.ge.f32.partialorder %v368, 0.0
    %vm881 = vcmp.ge.f32.partialorder %v369, 0.0
    %vm882 = vcmp.ge.f32.partialorder %v370, 0.0
    %vm883 = vcmp.ge.f32.partialorder %v371, 0.0
    %vm884 = vcmp.ge.f32.partialorder %v372, 0.0
    %vm885 = vcmp.ge.f32.partialorder %v373, 0.0
    %vm886 = vcmp.ge.f32.partialorder %v374, 0.0
    %vm887 = vcmp.ge.f32.partialorder %v375, 0.0
    %vm888 = vcmp.ge.f32.partialorder %v376, 0.0
    %vm889 = vcmp.ge.f32.partialorder %v377, 0.0
    %vm890 = vcmp.ge.f32.partialorder %v378, 0.0
    %vm891 = vcmp.ge.f32.partialorder %v379, 0.0
    %vm892 = vcmp.ge.f32.partialorder %v380, 0.0
    %vm893 = vcmp.ge.f32.partialorder %v381, 0.0
    %vm894 = vcmp.ge.f32.partialorder %v382, 0.0
    %vm895 = vcmp.ge.f32.partialorder %v383, 0.0
    %vm896 = vcmp.ge.f32.partialorder %v384, 0.0
    %vm897 = vcmp.ge.f32.partialorder %v385, 0.0
    %vm898 = vcmp.ge.f32.partialorder %v386, 0.0
    %vm899 = vcmp.ge.f32.partialorder %v387, 0.0
    %vm900 = vcmp.ge.f32.partialorder %v388, 0.0
    %vm901 = vcmp.ge.f32.partialorder %v389, 0.0
    %vm902 = vcmp.ge.f32.partialorder %v390, 0.0
    %vm903 = vcmp.ge.f32.partialorder %v391, 0.0
    %vm904 = vcmp.ge.f32.partialorder %v392, 0.0
    %vm905 = vcmp.ge.f32.partialorder %v393, 0.0
    %vm906 = vcmp.ge.f32.partialorder %v394, 0.0
    %vm907 = vcmp.ge.f32.partialorder %v395, 0.0
    %vm908 = vcmp.ge.f32.partialorder %v396, 0.0
    %vm909 = vcmp.ge.f32.partialorder %v397, 0.0
    %vm910 = vcmp.ge.f32.partialorder %v398, 0.0
    %vm911 = vcmp.ge.f32.partialorder %v399, 0.0
    %vm912 = vcmp.ge.f32.partialorder %v400, 0.0
    %vm913 = vcmp.ge.f32.partialorder %v401, 0.0
    %vm914 = vcmp.ge.f32.partialorder %v402, 0.0
    %vm915 = vcmp.ge.f32.partialorder %v403, 0.0
    %vm916 = vcmp.ge.f32.partialorder %v404, 0.0
    %vm917 = vcmp.ge.f32.partialorder %v405, 0.0
    %vm918 = vcmp.ge.f32.partialorder %v406, 0.0
    %vm919 = vcmp.ge.f32.partialorder %v407, 0.0
    %vm920 = vcmp.ge.f32.partialorder %v408, 0.0
    %vm921 = vcmp.ge.f32.partialorder %v409, 0.0
    %vm922 = vcmp.ge.f32.partialorder %v410, 0.0
    %vm923 = vcmp.ge.f32.partialorder %v411, 0.0
    %vm924 = vcmp.ge.f32.partialorder %v412, 0.0
    %vm925 = vcmp.ge.f32.partialorder %v413, 0.0
    %vm926 = vcmp.ge.f32.partialorder %v414, 0.0
    %vm927 = vcmp.ge.f32.partialorder %v415, 0.0
    %vm928 = vcmp.ge.f32.partialorder %v416, 0.0
    %vm929 = vcmp.ge.f32.partialorder %v417, 0.0
    %vm930 = vcmp.ge.f32.partialorder %v418, 0.0
    %vm931 = vcmp.ge.f32.partialorder %v419, 0.0
    %vm932 = vcmp.ge.f32.partialorder %v420, 0.0
    %vm933 = vcmp.ge.f32.partialorder %v421, 0.0
    %vm934 = vcmp.ge.f32.partialorder %v422, 0.0
    %vm935 = vcmp.ge.f32.partialorder %v423, 0.0
    %vm936 = vcmp.ge.f32.partialorder %v424, 0.0
    %vm937 = vcmp.ge.f32.partialorder %v425, 0.0
    %vm938 = vcmp.ge.f32.partialorder %v426, 0.0
    %vm939 = vcmp.ge.f32.partialorder %v427, 0.0
    %vm940 = vcmp.ge.f32.partialorder %v428, 0.0
    %vm941 = vcmp.ge.f32.partialorder %v429, 0.0
    %vm942 = vcmp.ge.f32.partialorder %v430, 0.0
    %vm943 = vcmp.ge.f32.partialorder %v431, 0.0
    %vm944 = vcmp.ge.f32.partialorder %v432, 0.0
    %vm945 = vcmp.ge.f32.partialorder %v433, 0.0
    %vm946 = vcmp.ge.f32.partialorder %v434, 0.0
    %vm947 = vcmp.ge.f32.partialorder %v435, 0.0
    %vm948 = vcmp.ge.f32.partialorder %v436, 0.0
    %vm949 = vcmp.ge.f32.partialorder %v437, 0.0
    %vm950 = vcmp.ge.f32.partialorder %v438, 0.0
    %vm951 = vcmp.ge.f32.partialorder %v439, 0.0
    %vm952 = vcmp.ge.f32.partialorder %v440, 0.0
    %vm953 = vcmp.ge.f32.partialorder %v441, 0.0
    %vm954 = vcmp.ge.f32.partialorder %v442, 0.0
    %vm955 = vcmp.ge.f32.partialorder %v443, 0.0
    %vm956 = vcmp.ge.f32.partialorder %v444, 0.0
    %vm957 = vcmp.ge.f32.partialorder %v445, 0.0
    %vm958 = vcmp.ge.f32.partialorder %v446, 0.0
    %vm959 = vcmp.ge.f32.partialorder %v447, 0.0
    %vm960 = vcmp.ge.f32.partialorder %v448, 0.0
    %vm961 = vcmp.ge.f32.partialorder %v449, 0.0
    %vm962 = vcmp.ge.f32.partialorder %v450, 0.0
    %vm963 = vcmp.ge.f32.partialorder %v451, 0.0
    %vm964 = vcmp.ge.f32.partialorder %v452, 0.0
    %vm965 = vcmp.ge.f32.partialorder %v453, 0.0
    %vm966 = vcmp.ge.f32.partialorder %v454, 0.0
    %vm967 = vcmp.ge.f32.partialorder %v455, 0.0
    %vm968 = vcmp.ge.f32.partialorder %v456, 0.0
    %vm969 = vcmp.ge.f32.partialorder %v457, 0.0
    %vm970 = vcmp.ge.f32.partialorder %v458, 0.0
    %vm971 = vcmp.ge.f32.partialorder %v459, 0.0
    %vm972 = vcmp.ge.f32.partialorder %v460, 0.0
    %vm973 = vcmp.ge.f32.partialorder %v461, 0.0
    %vm974 = vcmp.ge.f32.partialorder %v462, 0.0
    %vm975 = vcmp.ge.f32.partialorder %v463, 0.0
    %vm976 = vcmp.ge.f32.partialorder %v464, 0.0
    %vm977 = vcmp.ge.f32.partialorder %v465, 0.0
    %vm978 = vcmp.ge.f32.partialorder %v466, 0.0
    %vm979 = vcmp.ge.f32.partialorder %v467, 0.0
    %vm980 = vcmp.ge.f32.partialorder %v468, 0.0
    %vm981 = vcmp.ge.f32.partialorder %v469, 0.0
    %vm982 = vcmp.ge.f32.partialorder %v470, 0.0
    %vm983 = vcmp.ge.f32.partialorder %v471, 0.0
    %vm984 = vcmp.ge.f32.partialorder %v472, 0.0
    %vm985 = vcmp.ge.f32.partialorder %v473, 0.0
    %vm986 = vcmp.ge.f32.partialorder %v474, 0.0
    %vm987 = vcmp.ge.f32.partialorder %v475, 0.0
    %vm988 = vcmp.ge.f32.partialorder %v476, 0.0
    %vm989 = vcmp.ge.f32.partialorder %v477, 0.0
    %vm990 = vcmp.ge.f32.partialorder %v478, 0.0
    %vm991 = vcmp.ge.f32.partialorder %v479, 0.0
    %vm992 = vcmp.ge.f32.partialorder %v480, 0.0
    %vm993 = vcmp.ge.f32.partialorder %v481, 0.0
    %vm994 = vcmp.ge.f32.partialorder %v482, 0.0
    %vm995 = vcmp.ge.f32.partialorder %v483, 0.0
    %vm996 = vcmp.ge.f32.partialorder %v484, 0.0
    %vm997 = vcmp.ge.f32.partialorder %v485, 0.0
    %vm998 = vcmp.ge.f32.partialorder %v486, 0.0
    %vm999 = vcmp.ge.f32.partialorder %v487, 0.0
    %vm1000 = vcmp.ge.f32.partialorder %v488, 0.0
    %vm1001 = vcmp.ge.f32.partialorder %v489, 0.0
    %vm1002 = vcmp.ge.f32.partialorder %v490, 0.0
    %vm1003 = vcmp.ge.f32.partialorder %v491, 0.0
    %vm1004 = vcmp.ge.f32.partialorder %v492, 0.0
    %vm1005 = vcmp.ge.f32.partialorder %v493, 0.0
    %vm1006 = vcmp.ge.f32.partialorder %v494, 0.0
    %vm1007 = vcmp.ge.f32.partialorder %v495, 0.0
    %vm1008 = vcmp.ge.f32.partialorder %v496, 0.0
    %vm1009 = vcmp.ge.f32.partialorder %v497, 0.0
    %vm1010 = vcmp.ge.f32.partialorder %v498, 0.0
    %vm1011 = vcmp.ge.f32.partialorder %v499, 0.0
    %vm1012 = vcmp.ge.f32.partialorder %v500, 0.0
    %vm1013 = vcmp.ge.f32.partialorder %v501, 0.0
    %vm1014 = vcmp.ge.f32.partialorder %v502, 0.0
    %vm1015 = vcmp.ge.f32.partialorder %v503, 0.0
    %vm1016 = vcmp.ge.f32.partialorder %v504, 0.0
    %vm1017 = vcmp.ge.f32.partialorder %v505, 0.0
    %vm1018 = vcmp.ge.f32.partialorder %v506, 0.0
    %vm1019 = vcmp.ge.f32.partialorder %v507, 0.0
    %vm1020 = vcmp.ge.f32.partialorder %v508, 0.0
    %vm1021 = vcmp.ge.f32.partialorder %v509, 0.0
    %vm1022 = vcmp.ge.f32.partialorder %v510, 0.0
    %vm1023 = vcmp.ge.f32.partialorder %v511, 0.0
    %vm1024 = vcmp.ge.f32.partialorder %v512, 0.0
    %vm1025 = vcmp.ge.f32.partialorder %v513, 0.0
    %vm1026 = vcmp.ge.f32.partialorder %v514, 0.0
    %vm1027 = vcmp.ge.f32.partialorder %v515, 0.0
    %vm1028 = vcmp.ge.f32.partialorder %v516, 0.0
    %vm1029 = vcmp.ge.f32.partialorder %v517, 0.0
    %vm1030 = vcmp.ge.f32.partialorder %v518, 0.0
    %vm1031 = vcmp.ge.f32.partialorder %v519, 0.0
    %vm1032 = vcmp.ge.f32.partialorder %v520, 0.0
    %vm1033 = vcmp.ge.f32.partialorder %v521, 0.0
    %vm1034 = vcmp.ge.f32.partialorder %v522, 0.0
    %vm1035 = vcmp.ge.f32.partialorder %v523, 0.0
    %vm1036 = vcmp.ge.f32.partialorder %v524, 0.0
    %vm1037 = vcmp.ge.f32.partialorder %v525, 0.0
    %vm1038 = vcmp.ge.f32.partialorder %v526, 0.0
    %vm1039 = vcmp.ge.f32.partialorder %v527, 0.0
    %vm1040 = vcmp.ge.f32.partialorder %v528, 0.0
    %vm1041 = vcmp.ge.f32.partialorder %v529, 0.0
    %vm1042 = vcmp.ge.f32.partialorder %v530, 0.0
    %vm1043 = vcmp.ge.f32.partialorder %v531, 0.0
    %vm1044 = vcmp.ge.f32.partialorder %v532, 0.0
    %vm1045 = vcmp.ge.f32.partialorder %v533, 0.0
    %vm1046 = vcmp.ge.f32.partialorder %v534, 0.0
    %vm1047 = vcmp.ge.f32.partialorder %v535, 0.0
    %vm1048 = vcmp.ge.f32.partialorder %v536, 0.0
    %v1049 = vsel %vm537, 1, 0
    %v1050 = vsel %vm538, 1, 0
    %v1051 = vsel %vm539, 1, 0
    %v1052 = vsel %vm540, 1, 0
    %v1053 = vsel %vm541, 1, 0
    %v1054 = vsel %vm542, 1, 0
    %v1055 = vsel %vm543, 1, 0
    %v1056 = vsel %vm544, 1, 0
    %v1057 = vsel %vm545, 1, 0
    %v1058 = vsel %vm546, 1, 0
    %v1059 = vsel %vm547, 1, 0
    %v1060 = vsel %vm548, 1, 0
    %v1061 = vsel %vm549, 1, 0
    %v1062 = vsel %vm550, 1, 0
    %v1063 = vsel %vm551, 1, 0
    %v1064 = vsel %vm552, 1, 0
    %v1065 = vsel %vm553, 1, 0
    %v1066 = vsel %vm554, 1, 0
    %v1067 = vsel %vm555, 1, 0
    %v1068 = vsel %vm556, 1, 0
    %v1069 = vsel %vm557, 1, 0
    %v1070 = vsel %vm558, 1, 0
    %v1071 = vsel %vm559, 1, 0
    %v1072 = vsel %vm560, 1, 0
    %v1073 = vsel %vm561, 1, 0
    %v1074 = vsel %vm562, 1, 0
    %v1075 = vsel %vm563, 1, 0
    %v1076 = vsel %vm564, 1, 0
    %v1077 = vsel %vm565, 1, 0
    %v1078 = vsel %vm566, 1, 0
    %v1079 = vsel %vm567, 1, 0
    %v1080 = vsel %vm568, 1, 0
    %v1081 = vsel %vm569, 1, 0
    %v1082 = vsel %vm570, 1, 0
    %v1083 = vsel %vm571, 1, 0
    %v1084 = vsel %vm572, 1, 0
    %v1085 = vsel %vm573, 1, 0
    %v1086 = vsel %vm574, 1, 0
    %v1087 = vsel %vm575, 1, 0
    %v1088 = vsel %vm576, 1, 0
    %v1089 = vsel %vm577, 1, 0
    %v1090 = vsel %vm578, 1, 0
    %v1091 = vsel %vm579, 1, 0
    %v1092 = vsel %vm580, 1, 0
    %v1093 = vsel %vm581, 1, 0
    %v1094 = vsel %vm582, 1, 0
    %v1095 = vsel %vm583, 1, 0
    %v1096 = vsel %vm584, 1, 0
    %v1097 = vsel %vm585, 1, 0
    %v1098 = vsel %vm586, 1, 0
    %v1099 = vsel %vm587, 1, 0
    %v1100 = vsel %vm588, 1, 0
    %v1101 = vsel %vm589, 1, 0
    %v1102 = vsel %vm590, 1, 0
    %v1103 = vsel %vm591, 1, 0
    %v1104 = vsel %vm592, 1, 0
    %v1105 = vsel %vm593, 1, 0
    %v1106 = vsel %vm594, 1, 0
    %v1107 = vsel %vm595, 1, 0
    %v1108 = vsel %vm596, 1, 0
    %v1109 = vsel %vm597, 1, 0
    %v1110 = vsel %vm598, 1, 0
    %v1111 = vsel %vm599, 1, 0
    %v1112 = vsel %vm600, 1, 0
    %v1113 = vsel %vm601, 1, 0
    %v1114 = vsel %vm602, 1, 0
    %v1115 = vsel %vm603, 1, 0
    %v1116 = vsel %vm604, 1, 0
    %v1117 = vsel %vm605, 1, 0
    %v1118 = vsel %vm606, 1, 0
    %v1119 = vsel %vm607, 1, 0
    %v1120 = vsel %vm608, 1, 0
    %v1121 = vsel %vm609, 1, 0
    %v1122 = vsel %vm610, 1, 0
    %v1123 = vsel %vm611, 1, 0
    %v1124 = vsel %vm612, 1, 0
    %v1125 = vsel %vm613, 1, 0
    %v1126 = vsel %vm614, 1, 0
    %v1127 = vsel %vm615, 1, 0
    %v1128 = vsel %vm616, 1, 0
    %v1129 = vsel %vm617, 1, 0
    %v1130 = vsel %vm618, 1, 0
    %v1131 = vsel %vm619, 1, 0
    %v1132 = vsel %vm620, 1, 0
    %v1133 = vsel %vm621, 1, 0
    %v1134 = vsel %vm622, 1, 0
    %v1135 = vsel %vm623, 1, 0
    %v1136 = vsel %vm624, 1, 0
    %v1137 = vsel %vm625, 1, 0
    %v1138 = vsel %vm626, 1, 0
    %v1139 = vsel %vm627, 1, 0
    %v1140 = vsel %vm628, 1, 0
    %v1141 = vsel %vm629, 1, 0
    %v1142 = vsel %vm630, 1, 0
    %v1143 = vsel %vm631, 1, 0
    %v1144 = vsel %vm632, 1, 0
    %v1145 = vsel %vm633, 1, 0
    %v1146 = vsel %vm634, 1, 0
    %v1147 = vsel %vm635, 1, 0
    %v1148 = vsel %vm636, 1, 0
    %v1149 = vsel %vm637, 1, 0
    %v1150 = vsel %vm638, 1, 0
    %v1151 = vsel %vm639, 1, 0
    %v1152 = vsel %vm640, 1, 0
    %v1153 = vsel %vm641, 1, 0
    %v1154 = vsel %vm642, 1, 0
    %v1155 = vsel %vm643, 1, 0
    %v1156 = vsel %vm644, 1, 0
    %v1157 = vsel %vm645, 1, 0
    %v1158 = vsel %vm646, 1, 0
    %v1159 = vsel %vm647, 1, 0
    %v1160 = vsel %vm648, 1, 0
    %v1161 = vsel %vm649, 1, 0
    %v1162 = vsel %vm650, 1, 0
    %v1163 = vsel %vm651, 1, 0
    %v1164 = vsel %vm652, 1, 0
    %v1165 = vsel %vm653, 1, 0
    %v1166 = vsel %vm654, 1, 0
    %v1167 = vsel %vm655, 1, 0
    %v1168 = vsel %vm656, 1, 0
    %v1169 = vsel %vm657, 1, 0
    %v1170 = vsel %vm658, 1, 0
    %v1171 = vsel %vm659, 1, 0
    %v1172 = vsel %vm660, 1, 0
    %v1173 = vsel %vm661, 1, 0
    %v1174 = vsel %vm662, 1, 0
    %v1175 = vsel %vm663, 1, 0
    %v1176 = vsel %vm664, 1, 0
    %v1177 = vsel %vm665, 1, 0
    %v1178 = vsel %vm666, 1, 0
    %v1179 = vsel %vm667, 1, 0
    %v1180 = vsel %vm668, 1, 0
    %v1181 = vsel %vm669, 1, 0
    %v1182 = vsel %vm670, 1, 0
    %v1183 = vsel %vm671, 1, 0
    %v1184 = vsel %vm672, 1, 0
    %v1185 = vsel %vm673, 1, 0
    %v1186 = vsel %vm674, 1, 0
    %v1187 = vsel %vm675, 1, 0
    %v1188 = vsel %vm676, 1, 0
    %v1189 = vsel %vm677, 1, 0
    %v1190 = vsel %vm678, 1, 0
    %v1191 = vsel %vm679, 1, 0
    %v1192 = vsel %vm680, 1, 0
    %v1193 = vsel %vm681, 1, 0
    %v1194 = vsel %vm682, 1, 0
    %v1195 = vsel %vm683, 1, 0
    %v1196 = vsel %vm684, 1, 0
    %v1197 = vsel %vm685, 1, 0
    %v1198 = vsel %vm686, 1, 0
    %v1199 = vsel %vm687, 1, 0
    %v1200 = vsel %vm688, 1, 0
    %v1201 = vsel %vm689, 1, 0
    %v1202 = vsel %vm690, 1, 0
    %v1203 = vsel %vm691, 1, 0
    %v1204 = vsel %vm692, 1, 0
    %v1205 = vsel %vm693, 1, 0
    %v1206 = vsel %vm694, 1, 0
    %v1207 = vsel %vm695, 1, 0
    %v1208 = vsel %vm696, 1, 0
    %v1209 = vsel %vm697, 1, 0
    %v1210 = vsel %vm698, 1, 0
    %v1211 = vsel %vm699, 1, 0
    %v1212 = vsel %vm700, 1, 0
    %v1213 = vsel %vm701, 1, 0
    %v1214 = vsel %vm702, 1, 0
    %v1215 = vsel %vm703, 1, 0
    %v1216 = vsel %vm704, 1, 0
    %v1217 = vsel %vm705, 1, 0
    %v1218 = vsel %vm706, 1, 0
    %v1219 = vsel %vm707, 1, 0
    %v1220 = vsel %vm708, 1, 0
    %v1221 = vsel %vm709, 1, 0
    %v1222 = vsel %vm710, 1, 0
    %v1223 = vsel %vm711, 1, 0
    %v1224 = vsel %vm712, 1, 0
    %v1225 = vsel %vm713, 1, 0
    %v1226 = vsel %vm714, 1, 0
    %v1227 = vsel %vm715, 1, 0
    %v1228 = vsel %vm716, 1, 0
    %v1229 = vsel %vm717, 1, 0
    %v1230 = vsel %vm718, 1, 0
    %v1231 = vsel %vm719, 1, 0
    %v1232 = vsel %vm720, 1, 0
    %v1233 = vsel %vm721, 1, 0
    %v1234 = vsel %vm722, 1, 0
    %v1235 = vsel %vm723, 1, 0
    %v1236 = vsel %vm724, 1, 0
    %v1237 = vsel %vm725, 1, 0
    %v1238 = vsel %vm726, 1, 0
    %v1239 = vsel %vm727, 1, 0
    %v1240 = vsel %vm728, 1, 0
    %v1241 = vsel %vm729, 1, 0
    %v1242 = vsel %vm730, 1, 0
    %v1243 = vsel %vm731, 1, 0
    %v1244 = vsel %vm732, 1, 0
    %v1245 = vsel %vm733, 1, 0
    %v1246 = vsel %vm734, 1, 0
    %v1247 = vsel %vm735, 1, 0
    %v1248 = vsel %vm736, 1, 0
    %v1249 = vsel %vm737, 1, 0
    %v1250 = vsel %vm738, 1, 0
    %v1251 = vsel %vm739, 1, 0
    %v1252 = vsel %vm740, 1, 0
    %v1253 = vsel %vm741, 1, 0
    %v1254 = vsel %vm742, 1, 0
    %v1255 = vsel %vm743, 1, 0
    %v1256 = vsel %vm744, 1, 0
    %v1257 = vsel %vm745, 1, 0
    %v1258 = vsel %vm746, 1, 0
    %v1259 = vsel %vm747, 1, 0
    %v1260 = vsel %vm748, 1, 0
    %v1261 = vsel %vm749, 1, 0
    %v1262 = vsel %vm750, 1, 0
    %v1263 = vsel %vm751, 1, 0
    %v1264 = vsel %vm752, 1, 0
    %v1265 = vsel %vm753, 1, 0
    %v1266 = vsel %vm754, 1, 0
    %v1267 = vsel %vm755, 1, 0
    %v1268 = vsel %vm756, 1, 0
    %v1269 = vsel %vm757, 1, 0
    %v1270 = vsel %vm758, 1, 0
    %v1271 = vsel %vm759, 1, 0
    %v1272 = vsel %vm760, 1, 0
    %v1273 = vsel %vm761, 1, 0
    %v1274 = vsel %vm762, 1, 0
    %v1275 = vsel %vm763, 1, 0
    %v1276 = vsel %vm764, 1, 0
    %v1277 = vsel %vm765, 1, 0
    %v1278 = vsel %vm766, 1, 0
    %v1279 = vsel %vm767, 1, 0
    %v1280 = vsel %vm768, 1, 0
    %v1281 = vsel %vm769, 1, 0
    %v1282 = vsel %vm770, 1, 0
    %v1283 = vsel %vm771, 1, 0
    %v1284 = vsel %vm772, 1, 0
    %v1285 = vsel %vm773, 1, 0
    %v1286 = vsel %vm774, 1, 0
    %v1287 = vsel %vm775, 1, 0
    %v1288 = vsel %vm776, 1, 0
    %v1289 = vsel %vm777, 1, 0
    %v1290 = vsel %vm778, 1, 0
    %v1291 = vsel %vm779, 1, 0
    %v1292 = vsel %vm780, 1, 0
    %v1293 = vsel %vm781, 1, 0
    %v1294 = vsel %vm782, 1, 0
    %v1295 = vsel %vm783, 1, 0
    %v1296 = vsel %vm784, 1, 0
    %v1297 = vsel %vm785, 1, 0
    %v1298 = vsel %vm786, 1, 0
    %v1299 = vsel %vm787, 1, 0
    %v1300 = vsel %vm788, 1, 0
    %v1301 = vsel %vm789, 1, 0
    %v1302 = vsel %vm790, 1, 0
    %v1303 = vsel %vm791, 1, 0
    %v1304 = vsel %vm792, 1, 0
    %v1305 = vsel %vm793, 1, 0
    %v1306 = vsel %vm794, 1, 0
    %v1307 = vsel %vm795, 1, 0
    %v1308 = vsel %vm796, 1, 0
    %v1309 = vsel %vm797, 1, 0
    %v1310 = vsel %vm798, 1, 0
    %v1311 = vsel %vm799, 1, 0
    %v1312 = vsel %vm800, 1, 0
    %v1313 = vsel %vm801, 1, 0
    %v1314 = vsel %vm802, 1, 0
    %v1315 = vsel %vm803, 1, 0
    %v1316 = vsel %vm804, 1, 0
    %v1317 = vsel %vm805, 1, 0
    %v1318 = vsel %vm806, 1, 0
    %v1319 = vsel %vm807, 1, 0
    %v1320 = vsel %vm808, 1, 0
    %v1321 = vsel %vm809, 1, 0
    %v1322 = vsel %vm810, 1, 0
    %v1323 = vsel %vm811, 1, 0
    %v1324 = vsel %vm812, 1, 0
    %v1325 = vsel %vm813, 1, 0
    %v1326 = vsel %vm814, 1, 0
    %v1327 = vsel %vm815, 1, 0
    %v1328 = vsel %vm816, 1, 0
    %v1329 = vsel %vm817, 1, 0
    %v1330 = vsel %vm818, 1, 0
    %v1331 = vsel %vm819, 1, 0
    %v1332 = vsel %vm820, 1, 0
    %v1333 = vsel %vm821, 1, 0
    %v1334 = vsel %vm822, 1, 0
    %v1335 = vsel %vm823, 1, 0
    %v1336 = vsel %vm824, 1, 0
    %v1337 = vsel %vm825, 1, 0
    %v1338 = vsel %vm826, 1, 0
    %v1339 = vsel %vm827, 1, 0
    %v1340 = vsel %vm828, 1, 0
    %v1341 = vsel %vm829, 1, 0
    %v1342 = vsel %vm830, 1, 0
    %v1343 = vsel %vm831, 1, 0
    %v1344 = vsel %vm832, 1, 0
    %v1345 = vsel %vm833, 1, 0
    %v1346 = vsel %vm834, 1, 0
    %v1347 = vsel %vm835, 1, 0
    %v1348 = vsel %vm836, 1, 0
    %v1349 = vsel %vm837, 1, 0
    %v1350 = vsel %vm838, 1, 0
    %v1351 = vsel %vm839, 1, 0
    %v1352 = vsel %vm840, 1, 0
    %v1353 = vsel %vm841, 1, 0
    %v1354 = vsel %vm842, 1, 0
    %v1355 = vsel %vm843, 1, 0
    %v1356 = vsel %vm844, 1, 0
    %v1357 = vsel %vm845, 1, 0
    %v1358 = vsel %vm846, 1, 0
    %v1359 = vsel %vm847, 1, 0
    %v1360 = vsel %vm848, 1, 0
    %v1361 = vsel %vm849, 1, 0
    %v1362 = vsel %vm850, 1, 0
    %v1363 = vsel %vm851, 1, 0
    %v1364 = vsel %vm852, 1, 0
    %v1365 = vsel %vm853, 1, 0
    %v1366 = vsel %vm854, 1, 0
    %v1367 = vsel %vm855, 1, 0
    %v1368 = vsel %vm856, 1, 0
    %v1369 = vsel %vm857, 1, 0
    %v1370 = vsel %vm858, 1, 0
    %v1371 = vsel %vm859, 1, 0
    %v1372 = vsel %vm860, 1, 0
    %v1373 = vsel %vm861, 1, 0
    %v1374 = vsel %vm862, 1, 0
    %v1375 = vsel %vm863, 1, 0
    %v1376 = vsel %vm864, 1, 0
    %v1377 = vsel %vm865, 1, 0
    %v1378 = vsel %vm866, 1, 0
    %v1379 = vsel %vm867, 1, 0
    %v1380 = vsel %vm868, 1, 0
    %v1381 = vsel %vm869, 1, 0
    %v1382 = vsel %vm870, 1, 0
    %v1383 = vsel %vm871, 1, 0
    %v1384 = vsel %vm872, 1, 0
    %v1385 = vsel %vm873, 1, 0
    %v1386 = vsel %vm874, 1, 0
    %v1387 = vsel %vm875, 1, 0
    %v1388 = vsel %vm876, 1, 0
    %v1389 = vsel %vm877, 1, 0
    %v1390 = vsel %vm878, 1, 0
    %v1391 = vsel %vm879, 1, 0
    %v1392 = vsel %vm880, 1, 0
    %v1393 = vsel %vm881, 1, 0
    %v1394 = vsel %vm882, 1, 0
    %v1395 = vsel %vm883, 1, 0
    %v1396 = vsel %vm884, 1, 0
    %v1397 = vsel %vm885, 1, 0
    %v1398 = vsel %vm886, 1, 0
    %v1399 = vsel %vm887, 1, 0
    %v1400 = vsel %vm888, 1, 0
    %v1401 = vsel %vm889, 1, 0
    %v1402 = vsel %vm890, 1, 0
    %v1403 = vsel %vm891, 1, 0
    %v1404 = vsel %vm892, 1, 0
    %v1405 = vsel %vm893, 1, 0
    %v1406 = vsel %vm894, 1, 0
    %v1407 = vsel %vm895, 1, 0
    %v1408 = vsel %vm896, 1, 0
    %v1409 = vsel %vm897, 1, 0
    %v1410 = vsel %vm898, 1, 0
    %v1411 = vsel %vm899, 1, 0
    %v1412 = vsel %vm900, 1, 0
    %v1413 = vsel %vm901, 1, 0
    %v1414 = vsel %vm902, 1, 0
    %v1415 = vsel %vm903, 1, 0
    %v1416 = vsel %vm904, 1, 0
    %v1417 = vsel %vm905, 1, 0
    %v1418 = vsel %vm906, 1, 0
    %v1419 = vsel %vm907, 1, 0
    %v1420 = vsel %vm908, 1, 0
    %v1421 = vsel %vm909, 1, 0
    %v1422 = vsel %vm910, 1, 0
    %v1423 = vsel %vm911, 1, 0
    %v1424 = vsel %vm912, 1, 0
    %v1425 = vsel %vm913, 1, 0
    %v1426 = vsel %vm914, 1, 0
    %v1427 = vsel %vm915, 1, 0
    %v1428 = vsel %vm916, 1, 0
    %v1429 = vsel %vm917, 1, 0
    %v1430 = vsel %vm918, 1, 0
    %v1431 = vsel %vm919, 1, 0
    %v1432 = vsel %vm920, 1, 0
    %v1433 = vsel %vm921, 1, 0
    %v1434 = vsel %vm922, 1, 0
    %v1435 = vsel %vm923, 1, 0
    %v1436 = vsel %vm924, 1, 0
    %v1437 = vsel %vm925, 1, 0
    %v1438 = vsel %vm926, 1, 0
    %v1439 = vsel %vm927, 1, 0
    %v1440 = vsel %vm928, 1, 0
    %v1441 = vsel %vm929, 1, 0
    %v1442 = vsel %vm930, 1, 0
    %v1443 = vsel %vm931, 1, 0
    %v1444 = vsel %vm932, 1, 0
    %v1445 = vsel %vm933, 1, 0
    %v1446 = vsel %vm934, 1, 0
    %v1447 = vsel %vm935, 1, 0
    %v1448 = vsel %vm936, 1, 0
    %v1449 = vsel %vm937, 1, 0
    %v1450 = vsel %vm938, 1, 0
    %v1451 = vsel %vm939, 1, 0
    %v1452 = vsel %vm940, 1, 0
    %v1453 = vsel %vm941, 1, 0
    %v1454 = vsel %vm942, 1, 0
    %v1455 = vsel %vm943, 1, 0
    %v1456 = vsel %vm944, 1, 0
    %v1457 = vsel %vm945, 1, 0
    %v1458 = vsel %vm946, 1, 0
    %v1459 = vsel %vm947, 1, 0
    %v1460 = vsel %vm948, 1, 0
    %v1461 = vsel %vm949, 1, 0
    %v1462 = vsel %vm950, 1, 0
    %v1463 = vsel %vm951, 1, 0
    %v1464 = vsel %vm952, 1, 0
    %v1465 = vsel %vm953, 1, 0
    %v1466 = vsel %vm954, 1, 0
    %v1467 = vsel %vm955, 1, 0
    %v1468 = vsel %vm956, 1, 0
    %v1469 = vsel %vm957, 1, 0
    %v1470 = vsel %vm958, 1, 0
    %v1471 = vsel %vm959, 1, 0
    %v1472 = vsel %vm960, 1, 0
    %v1473 = vsel %vm961, 1, 0
    %v1474 = vsel %vm962, 1, 0
    %v1475 = vsel %vm963, 1, 0
    %v1476 = vsel %vm964, 1, 0
    %v1477 = vsel %vm965, 1, 0
    %v1478 = vsel %vm966, 1, 0
    %v1479 = vsel %vm967, 1, 0
    %v1480 = vsel %vm968, 1, 0
    %v1481 = vsel %vm969, 1, 0
    %v1482 = vsel %vm970, 1, 0
    %v1483 = vsel %vm971, 1, 0
    %v1484 = vsel %vm972, 1, 0
    %v1485 = vsel %vm973, 1, 0
    %v1486 = vsel %vm974, 1, 0
    %v1487 = vsel %vm975, 1, 0
    %v1488 = vsel %vm976, 1, 0
    %v1489 = vsel %vm977, 1, 0
    %v1490 = vsel %vm978, 1, 0
    %v1491 = vsel %vm979, 1, 0
    %v1492 = vsel %vm980, 1, 0
    %v1493 = vsel %vm981, 1, 0
    %v1494 = vsel %vm982, 1, 0
    %v1495 = vsel %vm983, 1, 0
    %v1496 = vsel %vm984, 1, 0
    %v1497 = vsel %vm985, 1, 0
    %v1498 = vsel %vm986, 1, 0
    %v1499 = vsel %vm987, 1, 0
    %v1500 = vsel %vm988, 1, 0
    %v1501 = vsel %vm989, 1, 0
    %v1502 = vsel %vm990, 1, 0
    %v1503 = vsel %vm991, 1, 0
    %v1504 = vsel %vm992, 1, 0
    %v1505 = vsel %vm993, 1, 0
    %v1506 = vsel %vm994, 1, 0
    %v1507 = vsel %vm995, 1, 0
    %v1508 = vsel %vm996, 1, 0
    %v1509 = vsel %vm997, 1, 0
    %v1510 = vsel %vm998, 1, 0
    %v1511 = vsel %vm999, 1, 0
    %v1512 = vsel %vm1000, 1, 0
    %v1513 = vsel %vm1001, 1, 0
    %v1514 = vsel %vm1002, 1, 0
    %v1515 = vsel %vm1003, 1, 0
    %v1516 = vsel %vm1004, 1, 0
    %v1517 = vsel %vm1005, 1, 0
    %v1518 = vsel %vm1006, 1, 0
    %v1519 = vsel %vm1007, 1, 0
    %v1520 = vsel %vm1008, 1, 0
    %v1521 = vsel %vm1009, 1, 0
    %v1522 = vsel %vm1010, 1, 0
    %v1523 = vsel %vm1011, 1, 0
    %v1524 = vsel %vm1012, 1, 0
    %v1525 = vsel %vm1013, 1, 0
    %v1526 = vsel %vm1014, 1, 0
    %v1527 = vsel %vm1015, 1, 0
    %v1528 = vsel %vm1016, 1, 0
    %v1529 = vsel %vm1017, 1, 0
    %v1530 = vsel %vm1018, 1, 0
    %v1531 = vsel %vm1019, 1, 0
    %v1532 = vsel %vm1020, 1, 0
    %v1533 = vsel %vm1021, 1, 0
    %v1534 = vsel %vm1022, 1, 0
    %v1535 = vsel %vm1023, 1, 0
    %v1536 = vsel %vm1024, 1, 0
    %v1537 = vsel %vm1025, 1, 0
    %v1538 = vsel %vm1026, 1, 0
    %v1539 = vsel %vm1027, 1, 0
    %v1540 = vsel %vm1028, 1, 0
    %v1541 = vsel %vm1029, 1, 0
    %v1542 = vsel %vm1030, 1, 0
    %v1543 = vsel %vm1031, 1, 0
    %v1544 = vsel %vm1032, 1, 0
    %v1545 = vsel %vm1033, 1, 0
    %v1546 = vsel %vm1034, 1, 0
    %v1547 = vsel %vm1035, 1, 0
    %v1548 = vsel %vm1036, 1, 0
    %v1549 = vsel %vm1037, 1, 0
    %v1550 = vsel %vm1038, 1, 0
    %v1551 = vsel %vm1039, 1, 0
    %v1552 = vsel %vm1040, 1, 0
    %v1553 = vsel %vm1041, 1, 0
    %v1554 = vsel %vm1042, 1, 0
    %v1555 = vsel %vm1043, 1, 0
    %v1556 = vsel %vm1044, 1, 0
    %v1557 = vsel %vm1045, 1, 0
    %v1558 = vsel %vm1046, 1, 0
    %v1559 = vsel %vm1047, 1, 0
    %v1560 = vsel %vm1048, 1, 0
    %v1561 = vcvt.s32.f32 %v1049
    %v1562 = vcvt.s32.f32 %v1050
    %v1563 = vcvt.s32.f32 %v1051
    %v1564 = vcvt.s32.f32 %v1052
    %v1565 = vcvt.s32.f32 %v1053
    %v1566 = vcvt.s32.f32 %v1054
    %v1567 = vcvt.s32.f32 %v1055
    %v1568 = vcvt.s32.f32 %v1056
    %v1569 = vcvt.s32.f32 %v1057
    %v1570 = vcvt.s32.f32 %v1058
    %v1571 = vcvt.s32.f32 %v1059
    %v1572 = vcvt.s32.f32 %v1060
    %v1573 = vcvt.s32.f32 %v1061
    %v1574 = vcvt.s32.f32 %v1062
    %v1575 = vcvt.s32.f32 %v1063
    %v1576 = vcvt.s32.f32 %v1064
    %v1577 = vcvt.s32.f32 %v1065
    %v1578 = vcvt.s32.f32 %v1066
    %v1579 = vcvt.s32.f32 %v1067
    %v1580 = vcvt.s32.f32 %v1068
    %v1581 = vcvt.s32.f32 %v1069
    %v1582 = vcvt.s32.f32 %v1070
    %v1583 = vcvt.s32.f32 %v1071
    %v1584 = vcvt.s32.f32 %v1072
    %v1585 = vcvt.s32.f32 %v1073
    %v1586 = vcvt.s32.f32 %v1074
    %v1587 = vcvt.s32.f32 %v1075
    %v1588 = vcvt.s32.f32 %v1076
    %v1589 = vcvt.s32.f32 %v1077
    %v1590 = vcvt.s32.f32 %v1078
    %v1591 = vcvt.s32.f32 %v1079
    %v1592 = vcvt.s32.f32 %v1080
    %v1593 = vcvt.s32.f32 %v1081
    %v1594 = vcvt.s32.f32 %v1082
    %v1595 = vcvt.s32.f32 %v1083
    %v1596 = vcvt.s32.f32 %v1084
    %v1597 = vcvt.s32.f32 %v1085
    %v1598 = vcvt.s32.f32 %v1086
    %v1599 = vcvt.s32.f32 %v1087
    %v1600 = vcvt.s32.f32 %v1088
    %v1601 = vcvt.s32.f32 %v1089
    %v1602 = vcvt.s32.f32 %v1090
    %v1603 = vcvt.s32.f32 %v1091
    %v1604 = vcvt.s32.f32 %v1092
    %v1605 = vcvt.s32.f32 %v1093
    %v1606 = vcvt.s32.f32 %v1094
    %v1607 = vcvt.s32.f32 %v1095
    %v1608 = vcvt.s32.f32 %v1096
    %v1609 = vcvt.s32.f32 %v1097
    %v1610 = vcvt.s32.f32 %v1098
    %v1611 = vcvt.s32.f32 %v1099
    %v1612 = vcvt.s32.f32 %v1100
    %v1613 = vcvt.s32.f32 %v1101
    %v1614 = vcvt.s32.f32 %v1102
    %v1615 = vcvt.s32.f32 %v1103
    %v1616 = vcvt.s32.f32 %v1104
    %v1617 = vcvt.s32.f32 %v1105
    %v1618 = vcvt.s32.f32 %v1106
    %v1619 = vcvt.s32.f32 %v1107
    %v1620 = vcvt.s32.f32 %v1108
    %v1621 = vcvt.s32.f32 %v1109
    %v1622 = vcvt.s32.f32 %v1110
    %v1623 = vcvt.s32.f32 %v1111
    %v1624 = vcvt.s32.f32 %v1112
    %v1625 = vcvt.s32.f32 %v1113
    %v1626 = vcvt.s32.f32 %v1114
    %v1627 = vcvt.s32.f32 %v1115
    %v1628 = vcvt.s32.f32 %v1116
    %v1629 = vcvt.s32.f32 %v1117
    %v1630 = vcvt.s32.f32 %v1118
    %v1631 = vcvt.s32.f32 %v1119
    %v1632 = vcvt.s32.f32 %v1120
    %v1633 = vcvt.s32.f32 %v1121
    %v1634 = vcvt.s32.f32 %v1122
    %v1635 = vcvt.s32.f32 %v1123
    %v1636 = vcvt.s32.f32 %v1124
    %v1637 = vcvt.s32.f32 %v1125
    %v1638 = vcvt.s32.f32 %v1126
    %v1639 = vcvt.s32.f32 %v1127
    %v1640 = vcvt.s32.f32 %v1128
    %v1641 = vcvt.s32.f32 %v1129
    %v1642 = vcvt.s32.f32 %v1130
    %v1643 = vcvt.s32.f32 %v1131
    %v1644 = vcvt.s32.f32 %v1132
    %v1645 = vcvt.s32.f32 %v1133
    %v1646 = vcvt.s32.f32 %v1134
    %v1647 = vcvt.s32.f32 %v1135
    %v1648 = vcvt.s32.f32 %v1136
    %v1649 = vcvt.s32.f32 %v1137
    %v1650 = vcvt.s32.f32 %v1138
    %v1651 = vcvt.s32.f32 %v1139
    %v1652 = vcvt.s32.f32 %v1140
    %v1653 = vcvt.s32.f32 %v1141
    %v1654 = vcvt.s32.f32 %v1142
    %v1655 = vcvt.s32.f32 %v1143
    %v1656 = vcvt.s32.f32 %v1144
    %v1657 = vcvt.s32.f32 %v1145
    %v1658 = vcvt.s32.f32 %v1146
    %v1659 = vcvt.s32.f32 %v1147
    %v1660 = vcvt.s32.f32 %v1148
    %v1661 = vcvt.s32.f32 %v1149
    %v1662 = vcvt.s32.f32 %v1150
    %v1663 = vcvt.s32.f32 %v1151
    %v1664 = vcvt.s32.f32 %v1152
    %v1665 = vcvt.s32.f32 %v1153
    %v1666 = vcvt.s32.f32 %v1154
    %v1667 = vcvt.s32.f32 %v1155
    %v1668 = vcvt.s32.f32 %v1156
    %v1669 = vcvt.s32.f32 %v1157
    %v1670 = vcvt.s32.f32 %v1158
    %v1671 = vcvt.s32.f32 %v1159
    %v1672 = vcvt.s32.f32 %v1160
    %v1673 = vcvt.s32.f32 %v1161
    %v1674 = vcvt.s32.f32 %v1162
    %v1675 = vcvt.s32.f32 %v1163
    %v1676 = vcvt.s32.f32 %v1164
    %v1677 = vcvt.s32.f32 %v1165
    %v1678 = vcvt.s32.f32 %v1166
    %v1679 = vcvt.s32.f32 %v1167
    %v1680 = vcvt.s32.f32 %v1168
    %v1681 = vcvt.s32.f32 %v1169
    %v1682 = vcvt.s32.f32 %v1170
    %v1683 = vcvt.s32.f32 %v1171
    %v1684 = vcvt.s32.f32 %v1172
    %v1685 = vcvt.s32.f32 %v1173
    %v1686 = vcvt.s32.f32 %v1174
    %v1687 = vcvt.s32.f32 %v1175
    %v1688 = vcvt.s32.f32 %v1176
    %v1689 = vcvt.s32.f32 %v1177
    %v1690 = vcvt.s32.f32 %v1178
    %v1691 = vcvt.s32.f32 %v1179
    %v1692 = vcvt.s32.f32 %v1180
    %v1693 = vcvt.s32.f32 %v1181
    %v1694 = vcvt.s32.f32 %v1182
    %v1695 = vcvt.s32.f32 %v1183
    %v1696 = vcvt.s32.f32 %v1184
    %v1697 = vcvt.s32.f32 %v1185
    %v1698 = vcvt.s32.f32 %v1186
    %v1699 = vcvt.s32.f32 %v1187
    %v1700 = vcvt.s32.f32 %v1188
    %v1701 = vcvt.s32.f32 %v1189
    %v1702 = vcvt.s32.f32 %v1190
    %v1703 = vcvt.s32.f32 %v1191
    %v1704 = vcvt.s32.f32 %v1192
    %v1705 = vcvt.s32.f32 %v1193
    %v1706 = vcvt.s32.f32 %v1194
    %v1707 = vcvt.s32.f32 %v1195
    %v1708 = vcvt.s32.f32 %v1196
    %v1709 = vcvt.s32.f32 %v1197
    %v1710 = vcvt.s32.f32 %v1198
    %v1711 = vcvt.s32.f32 %v1199
    %v1712 = vcvt.s32.f32 %v1200
    %v1713 = vcvt.s32.f32 %v1201
    %v1714 = vcvt.s32.f32 %v1202
    %v1715 = vcvt.s32.f32 %v1203
    %v1716 = vcvt.s32.f32 %v1204
    %v1717 = vcvt.s32.f32 %v1205
    %v1718 = vcvt.s32.f32 %v1206
    %v1719 = vcvt.s32.f32 %v1207
    %v1720 = vcvt.s32.f32 %v1208
    %v1721 = vcvt.s32.f32 %v1209
    %v1722 = vcvt.s32.f32 %v1210
    %v1723 = vcvt.s32.f32 %v1211
    %v1724 = vcvt.s32.f32 %v1212
    %v1725 = vcvt.s32.f32 %v1213
    %v1726 = vcvt.s32.f32 %v1214
    %v1727 = vcvt.s32.f32 %v1215
    %v1728 = vcvt.s32.f32 %v1216
    %v1729 = vcvt.s32.f32 %v1217
    %v1730 = vcvt.s32.f32 %v1218
    %v1731 = vcvt.s32.f32 %v1219
    %v1732 = vcvt.s32.f32 %v1220
    %v1733 = vcvt.s32.f32 %v1221
    %v1734 = vcvt.s32.f32 %v1222
    %v1735 = vcvt.s32.f32 %v1223
    %v1736 = vcvt.s32.f32 %v1224
    %v1737 = vcvt.s32.f32 %v1225
    %v1738 = vcvt.s32.f32 %v1226
    %v1739 = vcvt.s32.f32 %v1227
    %v1740 = vcvt.s32.f32 %v1228
    %v1741 = vcvt.s32.f32 %v1229
    %v1742 = vcvt.s32.f32 %v1230
    %v1743 = vcvt.s32.f32 %v1231
    %v1744 = vcvt.s32.f32 %v1232
    %v1745 = vcvt.s32.f32 %v1233
    %v1746 = vcvt.s32.f32 %v1234
    %v1747 = vcvt.s32.f32 %v1235
    %v1748 = vcvt.s32.f32 %v1236
    %v1749 = vcvt.s32.f32 %v1237
    %v1750 = vcvt.s32.f32 %v1238
    %v1751 = vcvt.s32.f32 %v1239
    %v1752 = vcvt.s32.f32 %v1240
    %v1753 = vcvt.s32.f32 %v1241
    %v1754 = vcvt.s32.f32 %v1242
    %v1755 = vcvt.s32.f32 %v1243
    %v1756 = vcvt.s32.f32 %v1244
    %v1757 = vcvt.s32.f32 %v1245
    %v1758 = vcvt.s32.f32 %v1246
    %v1759 = vcvt.s32.f32 %v1247
    %v1760 = vcvt.s32.f32 %v1248
    %v1761 = vcvt.s32.f32 %v1249
    %v1762 = vcvt.s32.f32 %v1250
    %v1763 = vcvt.s32.f32 %v1251
    %v1764 = vcvt.s32.f32 %v1252
    %v1765 = vcvt.s32.f32 %v1253
    %v1766 = vcvt.s32.f32 %v1254
    %v1767 = vcvt.s32.f32 %v1255
    %v1768 = vcvt.s32.f32 %v1256
    %v1769 = vcvt.s32.f32 %v1257
    %v1770 = vcvt.s32.f32 %v1258
    %v1771 = vcvt.s32.f32 %v1259
    %v1772 = vcvt.s32.f32 %v1260
    %v1773 = vcvt.s32.f32 %v1261
    %v1774 = vcvt.s32.f32 %v1262
    %v1775 = vcvt.s32.f32 %v1263
    %v1776 = vcvt.s32.f32 %v1264
    %v1777 = vcvt.s32.f32 %v1265
    %v1778 = vcvt.s32.f32 %v1266
    %v1779 = vcvt.s32.f32 %v1267
    %v1780 = vcvt.s32.f32 %v1268
    %v1781 = vcvt.s32.f32 %v1269
    %v1782 = vcvt.s32.f32 %v1270
    %v1783 = vcvt.s32.f32 %v1271
    %v1784 = vcvt.s32.f32 %v1272
    %v1785 = vcvt.s32.f32 %v1273
    %v1786 = vcvt.s32.f32 %v1274
    %v1787 = vcvt.s32.f32 %v1275
    %v1788 = vcvt.s32.f32 %v1276
    %v1789 = vcvt.s32.f32 %v1277
    %v1790 = vcvt.s32.f32 %v1278
    %v1791 = vcvt.s32.f32 %v1279
    %v1792 = vcvt.s32.f32 %v1280
    %v1793 = vcvt.s32.f32 %v1281
    %v1794 = vcvt.s32.f32 %v1282
    %v1795 = vcvt.s32.f32 %v1283
    %v1796 = vcvt.s32.f32 %v1284
    %v1797 = vcvt.s32.f32 %v1285
    %v1798 = vcvt.s32.f32 %v1286
    %v1799 = vcvt.s32.f32 %v1287
    %v1800 = vcvt.s32.f32 %v1288
    %v1801 = vcvt.s32.f32 %v1289
    %v1802 = vcvt.s32.f32 %v1290
    %v1803 = vcvt.s32.f32 %v1291
    %v1804 = vcvt.s32.f32 %v1292
    %v1805 = vcvt.s32.f32 %v1293
    %v1806 = vcvt.s32.f32 %v1294
    %v1807 = vcvt.s32.f32 %v1295
    %v1808 = vcvt.s32.f32 %v1296
    %v1809 = vcvt.s32.f32 %v1297
    %v1810 = vcvt.s32.f32 %v1298
    %v1811 = vcvt.s32.f32 %v1299
    %v1812 = vcvt.s32.f32 %v1300
    %v1813 = vcvt.s32.f32 %v1301
    %v1814 = vcvt.s32.f32 %v1302
    %v1815 = vcvt.s32.f32 %v1303
    %v1816 = vcvt.s32.f32 %v1304
    %v1817 = vcvt.s32.f32 %v1305
    %v1818 = vcvt.s32.f32 %v1306
    %v1819 = vcvt.s32.f32 %v1307
    %v1820 = vcvt.s32.f32 %v1308
    %v1821 = vcvt.s32.f32 %v1309
    %v1822 = vcvt.s32.f32 %v1310
    %v1823 = vcvt.s32.f32 %v1311
    %v1824 = vcvt.s32.f32 %v1312
    %v1825 = vcvt.s32.f32 %v1313
    %v1826 = vcvt.s32.f32 %v1314
    %v1827 = vcvt.s32.f32 %v1315
    %v1828 = vcvt.s32.f32 %v1316
    %v1829 = vcvt.s32.f32 %v1317
    %v1830 = vcvt.s32.f32 %v1318
    %v1831 = vcvt.s32.f32 %v1319
    %v1832 = vcvt.s32.f32 %v1320
    %v1833 = vcvt.s32.f32 %v1321
    %v1834 = vcvt.s32.f32 %v1322
    %v1835 = vcvt.s32.f32 %v1323
    %v1836 = vcvt.s32.f32 %v1324
    %v1837 = vcvt.s32.f32 %v1325
    %v1838 = vcvt.s32.f32 %v1326
    %v1839 = vcvt.s32.f32 %v1327
    %v1840 = vcvt.s32.f32 %v1328
    %v1841 = vcvt.s32.f32 %v1329
    %v1842 = vcvt.s32.f32 %v1330
    %v1843 = vcvt.s32.f32 %v1331
    %v1844 = vcvt.s32.f32 %v1332
    %v1845 = vcvt.s32.f32 %v1333
    %v1846 = vcvt.s32.f32 %v1334
    %v1847 = vcvt.s32.f32 %v1335
    %v1848 = vcvt.s32.f32 %v1336
    %v1849 = vcvt.s32.f32 %v1337
    %v1850 = vcvt.s32.f32 %v1338
    %v1851 = vcvt.s32.f32 %v1339
    %v1852 = vcvt.s32.f32 %v1340
    %v1853 = vcvt.s32.f32 %v1341
    %v1854 = vcvt.s32.f32 %v1342
    %v1855 = vcvt.s32.f32 %v1343
    %v1856 = vcvt.s32.f32 %v1344
    %v1857 = vcvt.s32.f32 %v1345
    %v1858 = vcvt.s32.f32 %v1346
    %v1859 = vcvt.s32.f32 %v1347
    %v1860 = vcvt.s32.f32 %v1348
    %v1861 = vcvt.s32.f32 %v1349
    %v1862 = vcvt.s32.f32 %v1350
    %v1863 = vcvt.s32.f32 %v1351
    %v1864 = vcvt.s32.f32 %v1352
    %v1865 = vcvt.s32.f32 %v1353
    %v1866 = vcvt.s32.f32 %v1354
    %v1867 = vcvt.s32.f32 %v1355
    %v1868 = vcvt.s32.f32 %v1356
    %v1869 = vcvt.s32.f32 %v1357
    %v1870 = vcvt.s32.f32 %v1358
    %v1871 = vcvt.s32.f32 %v1359
    %v1872 = vcvt.s32.f32 %v1360
    %v1873 = vcvt.s32.f32 %v1361
    %v1874 = vcvt.s32.f32 %v1362
    %v1875 = vcvt.s32.f32 %v1363
    %v1876 = vcvt.s32.f32 %v1364
    %v1877 = vcvt.s32.f32 %v1365
    %v1878 = vcvt.s32.f32 %v1366
    %v1879 = vcvt.s32.f32 %v1367
    %v1880 = vcvt.s32.f32 %v1368
    %v1881 = vcvt.s32.f32 %v1369
    %v1882 = vcvt.s32.f32 %v1370
    %v1883 = vcvt.s32.f32 %v1371
    %v1884 = vcvt.s32.f32 %v1372
    %v1885 = vcvt.s32.f32 %v1373
    %v1886 = vcvt.s32.f32 %v1374
    %v1887 = vcvt.s32.f32 %v1375
    %v1888 = vcvt.s32.f32 %v1376
    %v1889 = vcvt.s32.f32 %v1377
    %v1890 = vcvt.s32.f32 %v1378
    %v1891 = vcvt.s32.f32 %v1379
    %v1892 = vcvt.s32.f32 %v1380
    %v1893 = vcvt.s32.f32 %v1381
    %v1894 = vcvt.s32.f32 %v1382
    %v1895 = vcvt.s32.f32 %v1383
    %v1896 = vcvt.s32.f32 %v1384
    %v1897 = vcvt.s32.f32 %v1385
    %v1898 = vcvt.s32.f32 %v1386
    %v1899 = vcvt.s32.f32 %v1387
    %v1900 = vcvt.s32.f32 %v1388
    %v1901 = vcvt.s32.f32 %v1389
    %v1902 = vcvt.s32.f32 %v1390
    %v1903 = vcvt.s32.f32 %v1391
    %v1904 = vcvt.s32.f32 %v1392
    %v1905 = vcvt.s32.f32 %v1393
    %v1906 = vcvt.s32.f32 %v1394
    %v1907 = vcvt.s32.f32 %v1395
    %v1908 = vcvt.s32.f32 %v1396
    %v1909 = vcvt.s32.f32 %v1397
    %v1910 = vcvt.s32.f32 %v1398
    %v1911 = vcvt.s32.f32 %v1399
    %v1912 = vcvt.s32.f32 %v1400
    %v1913 = vcvt.s32.f32 %v1401
    %v1914 = vcvt.s32.f32 %v1402
    %v1915 = vcvt.s32.f32 %v1403
    %v1916 = vcvt.s32.f32 %v1404
    %v1917 = vcvt.s32.f32 %v1405
    %v1918 = vcvt.s32.f32 %v1406
    %v1919 = vcvt.s32.f32 %v1407
    %v1920 = vcvt.s32.f32 %v1408
    %v1921 = vcvt.s32.f32 %v1409
    %v1922 = vcvt.s32.f32 %v1410
    %v1923 = vcvt.s32.f32 %v1411
    %v1924 = vcvt.s32.f32 %v1412
    %v1925 = vcvt.s32.f32 %v1413
    %v1926 = vcvt.s32.f32 %v1414
    %v1927 = vcvt.s32.f32 %v1415
    %v1928 = vcvt.s32.f32 %v1416
    %v1929 = vcvt.s32.f32 %v1417
    %v1930 = vcvt.s32.f32 %v1418
    %v1931 = vcvt.s32.f32 %v1419
    %v1932 = vcvt.s32.f32 %v1420
    %v1933 = vcvt.s32.f32 %v1421
    %v1934 = vcvt.s32.f32 %v1422
    %v1935 = vcvt.s32.f32 %v1423
    %v1936 = vcvt.s32.f32 %v1424
    %v1937 = vcvt.s32.f32 %v1425
    %v1938 = vcvt.s32.f32 %v1426
    %v1939 = vcvt.s32.f32 %v1427
    %v1940 = vcvt.s32.f32 %v1428
    %v1941 = vcvt.s32.f32 %v1429
    %v1942 = vcvt.s32.f32 %v1430
    %v1943 = vcvt.s32.f32 %v1431
    %v1944 = vcvt.s32.f32 %v1432
    %v1945 = vcvt.s32.f32 %v1433
    %v1946 = vcvt.s32.f32 %v1434
    %v1947 = vcvt.s32.f32 %v1435
    %v1948 = vcvt.s32.f32 %v1436
    %v1949 = vcvt.s32.f32 %v1437
    %v1950 = vcvt.s32.f32 %v1438
    %v1951 = vcvt.s32.f32 %v1439
    %v1952 = vcvt.s32.f32 %v1440
    %v1953 = vcvt.s32.f32 %v1441
    %v1954 = vcvt.s32.f32 %v1442
    %v1955 = vcvt.s32.f32 %v1443
    %v1956 = vcvt.s32.f32 %v1444
    %v1957 = vcvt.s32.f32 %v1445
    %v1958 = vcvt.s32.f32 %v1446
    %v1959 = vcvt.s32.f32 %v1447
    %v1960 = vcvt.s32.f32 %v1448
    %v1961 = vcvt.s32.f32 %v1449
    %v1962 = vcvt.s32.f32 %v1450
    %v1963 = vcvt.s32.f32 %v1451
    %v1964 = vcvt.s32.f32 %v1452
    %v1965 = vcvt.s32.f32 %v1453
    %v1966 = vcvt.s32.f32 %v1454
    %v1967 = vcvt.s32.f32 %v1455
    %v1968 = vcvt.s32.f32 %v1456
    %v1969 = vcvt.s32.f32 %v1457
    %v1970 = vcvt.s32.f32 %v1458
    %v1971 = vcvt.s32.f32 %v1459
    %v1972 = vcvt.s32.f32 %v1460
    %v1973 = vcvt.s32.f32 %v1461
    %v1974 = vcvt.s32.f32 %v1462
    %v1975 = vcvt.s32.f32 %v1463
    %v1976 = vcvt.s32.f32 %v1464
    %v1977 = vcvt.s32.f32 %v1465
    %v1978 = vcvt.s32.f32 %v1466
    %v1979 = vcvt.s32.f32 %v1467
    %v1980 = vcvt.s32.f32 %v1468
    %v1981 = vcvt.s32.f32 %v1469
    %v1982 = vcvt.s32.f32 %v1470
    %v1983 = vcvt.s32.f32 %v1471
    %v1984 = vcvt.s32.f32 %v1472
    %v1985 = vcvt.s32.f32 %v1473
    %v1986 = vcvt.s32.f32 %v1474
    %v1987 = vcvt.s32.f32 %v1475
    %v1988 = vcvt.s32.f32 %v1476
    %v1989 = vcvt.s32.f32 %v1477
    %v1990 = vcvt.s32.f32 %v1478
    %v1991 = vcvt.s32.f32 %v1479
    %v1992 = vcvt.s32.f32 %v1480
    %v1993 = vcvt.s32.f32 %v1481
    %v1994 = vcvt.s32.f32 %v1482
    %v1995 = vcvt.s32.f32 %v1483
    %v1996 = vcvt.s32.f32 %v1484
    %v1997 = vcvt.s32.f32 %v1485
    %v1998 = vcvt.s32.f32 %v1486
    %v1999 = vcvt.s32.f32 %v1487
    %v2000 = vcvt.s32.f32 %v1488
    %v2001 = vcvt.s32.f32 %v1489
    %v2002 = vcvt.s32.f32 %v1490
    %v2003 = vcvt.s32.f32 %v1491
    %v2004 = vcvt.s32.f32 %v1492
    %v2005 = vcvt.s32.f32 %v1493
    %v2006 = vcvt.s32.f32 %v1494
    %v2007 = vcvt.s32.f32 %v1495
    %v2008 = vcvt.s32.f32 %v1496
    %v2009 = vcvt.s32.f32 %v1497
    %v2010 = vcvt.s32.f32 %v1498
    %v2011 = vcvt.s32.f32 %v1499
    %v2012 = vcvt.s32.f32 %v1500
    %v2013 = vcvt.s32.f32 %v1501
    %v2014 = vcvt.s32.f32 %v1502
    %v2015 = vcvt.s32.f32 %v1503
    %v2016 = vcvt.s32.f32 %v1504
    %v2017 = vcvt.s32.f32 %v1505
    %v2018 = vcvt.s32.f32 %v1506
    %v2019 = vcvt.s32.f32 %v1507
    %v2020 = vcvt.s32.f32 %v1508
    %v2021 = vcvt.s32.f32 %v1509
    %v2022 = vcvt.s32.f32 %v1510
    %v2023 = vcvt.s32.f32 %v1511
    %v2024 = vcvt.s32.f32 %v1512
    %v2025 = vcvt.s32.f32 %v1513
    %v2026 = vcvt.s32.f32 %v1514
    %v2027 = vcvt.s32.f32 %v1515
    %v2028 = vcvt.s32.f32 %v1516
    %v2029 = vcvt.s32.f32 %v1517
    %v2030 = vcvt.s32.f32 %v1518
    %v2031 = vcvt.s32.f32 %v1519
    %v2032 = vcvt.s32.f32 %v1520
    %v2033 = vcvt.s32.f32 %v1521
    %v2034 = vcvt.s32.f32 %v1522
    %v2035 = vcvt.s32.f32 %v1523
    %v2036 = vcvt.s32.f32 %v1524
    %v2037 = vcvt.s32.f32 %v1525
    %v2038 = vcvt.s32.f32 %v1526
    %v2039 = vcvt.s32.f32 %v1527
    %v2040 = vcvt.s32.f32 %v1528
    %v2041 = vcvt.s32.f32 %v1529
    %v2042 = vcvt.s32.f32 %v1530
    %v2043 = vcvt.s32.f32 %v1531
    %v2044 = vcvt.s32.f32 %v1532
    %v2045 = vcvt.s32.f32 %v1533
    %v2046 = vcvt.s32.f32 %v1534
    %v2047 = vcvt.s32.f32 %v1535
    %v2048 = vcvt.s32.f32 %v1536
    %v2049 = vcvt.s32.f32 %v1537
    %v2050 = vcvt.s32.f32 %v1538
    %v2051 = vcvt.s32.f32 %v1539
    %v2052 = vcvt.s32.f32 %v1540
    %v2053 = vcvt.s32.f32 %v1541
    %v2054 = vcvt.s32.f32 %v1542
    %v2055 = vcvt.s32.f32 %v1543
    %v2056 = vcvt.s32.f32 %v1544
    %v2057 = vcvt.s32.f32 %v1545
    %v2058 = vcvt.s32.f32 %v1546
    %v2059 = vcvt.s32.f32 %v1547
    %v2060 = vcvt.s32.f32 %v1548
    %v2061 = vcvt.s32.f32 %v1549
    %v2062 = vcvt.s32.f32 %v1550
    %v2063 = vcvt.s32.f32 %v1551
    %v2064 = vcvt.s32.f32 %v1552
    %v2065 = vcvt.s32.f32 %v1553
    %v2066 = vcvt.s32.f32 %v1554
    %v2067 = vcvt.s32.f32 %v1555
    %v2068 = vcvt.s32.f32 %v1556
    %v2069 = vcvt.s32.f32 %v1557
    %v2070 = vcvt.s32.f32 %v1558
    %v2071 = vcvt.s32.f32 %v1559
    %v2072 = vcvt.s32.f32 %v1560
    %2073 = vst [vmem:[#allocation5] sm:$0xff] %v1561
    %2074 = vst [vmem:[#allocation5 + $0x8] sm:$0xff] %v1562
    %2075 = vst [vmem:[#allocation5 + $0x10] sm:$0xff] %v1563
    %2076 = vst [vmem:[#allocation5 + $0x18] sm:$0xff] %v1564
    %2077 = vst [vmem:[#allocation5 + $0x20] sm:$0xff] %v1565
    %2078 = vst [vmem:[#allocation5 + $0x28] sm:$0xff] %v1566
    %2079 = vst [vmem:[#allocation5 + $0x30] sm:$0xff] %v1567
    %2080 = vst [vmem:[#allocation5 + $0x38] sm:$0xff] %v1568
    %2081 = vst [vmem:[#allocation5 + $0x40] sm:$0xff] %v1569
    %2082 = vst [vmem:[#allocation5 + $0x48] sm:$0xff] %v1570
    %2083 = vst [vmem:[#allocation5 + $0x50] sm:$0xff] %v1571
    %2084 = vst [vmem:[#allocation5 + $0x58] sm:$0xff] %v1572
    %2085 = vst [vmem:[#allocation5 + $0x60] sm:$0xff] %v1573
    %2086 = vst [vmem:[#allocation5 + $0x68] sm:$0xff] %v1574
    %2087 = vst [vmem:[#allocation5 + $0x70] sm:$0xff] %v1575
    %2088 = vst [vmem:[#allocation5 + $0x78] sm:$0xff] %v1576
    %2089 = vst [vmem:[#allocation5 + $0x80] sm:$0xff] %v1577
    %2090 = vst [vmem:[#allocation5 + $0x88] sm:$0xff] %v1578
    %2091 = vst [vmem:[#allocation5 + $0x90] sm:$0xff] %v1579
    %2092 = vst [vmem:[#allocation5 + $0x98] sm:$0xff] %v1580
    %2093 = vst [vmem:[#allocation5 + $0xa0] sm:$0xff] %v1581
    %2094 = vst [vmem:[#allocation5 + $0xa8] sm:$0xff] %v1582
    %2095 = vst [vmem:[#allocation5 + $0xb0] sm:$0xff] %v1583
    %2096 = vst [vmem:[#allocation5 + $0xb8] sm:$0xff] %v1584
    %2097 = vst [vmem:[#allocation5 + $0xc0] sm:$0xff] %v1585
    %2098 = vst [vmem:[#allocation5 + $0xc8] sm:$0xff] %v1586
    %2099 = vst [vmem:[#allocation5 + $0xd0] sm:$0xff] %v1587
    %2100 = vst [vmem:[#allocation5 + $0xd8] sm:$0xff] %v1588
    %2101 = vst [vmem:[#allocation5 + $0xe0] sm:$0xff] %v1589
    %2102 = vst [vmem:[#allocation5 + $0xe8] sm:$0xff] %v1590
    %2103 = vst [vmem:[#allocation5 + $0xf0] sm:$0xff] %v1591
    %2104 = vst [vmem:[#allocation5 + $0xf8] sm:$0xff] %v1592
    %2105 = vst [vmem:[#allocation5 + $0x100] sm:$0xff] %v1593
    %2106 = vst [vmem:[#allocation5 + $0x108] sm:$0xff] %v1594
    %2107 = vst [vmem:[#allocation5 + $0x110] sm:$0xff] %v1595
    %2108 = vst [vmem:[#allocation5 + $0x118] sm:$0xff] %v1596
    %2109 = vst [vmem:[#allocation5 + $0x120] sm:$0xff] %v1597
    %2110 = vst [vmem:[#allocation5 + $0x128] sm:$0xff] %v1598
    %2111 = vst [vmem:[#allocation5 + $0x130] sm:$0xff] %v1599
    %2112 = vst [vmem:[#allocation5 + $0x138] sm:$0xff] %v1600
    %2113 = vst [vmem:[#allocation5 + $0x140] sm:$0xff] %v1601
    %2114 = vst [vmem:[#allocation5 + $0x148] sm:$0xff] %v1602
    %2115 = vst [vmem:[#allocation5 + $0x150] sm:$0xff] %v1603
    %2116 = vst [vmem:[#allocation5 + $0x158] sm:$0xff] %v1604
    %2117 = vst [vmem:[#allocation5 + $0x160] sm:$0xff] %v1605
    %2118 = vst [vmem:[#allocation5 + $0x168] sm:$0xff] %v1606
    %2119 = vst [vmem:[#allocation5 + $0x170] sm:$0xff] %v1607
    %2120 = vst [vmem:[#allocation5 + $0x178] sm:$0xff] %v1608
    %2121 = vst [vmem:[#allocation5 + $0x180] sm:$0xff] %v1609
    %2122 = vst [vmem:[#allocation5 + $0x188] sm:$0xff] %v1610
    %2123 = vst [vmem:[#allocation5 + $0x190] sm:$0xff] %v1611
    %2124 = vst [vmem:[#allocation5 + $0x198] sm:$0xff] %v1612
    %2125 = vst [vmem:[#allocation5 + $0x1a0] sm:$0xff] %v1613
    %2126 = vst [vmem:[#allocation5 + $0x1a8] sm:$0xff] %v1614
    %2127 = vst [vmem:[#allocation5 + $0x1b0] sm:$0xff] %v1615
    %2128 = vst [vmem:[#allocation5 + $0x1b8] sm:$0xff] %v1616
    %2129 = vst [vmem:[#allocation5 + $0x1c0] sm:$0xff] %v1617
    %2130 = vst [vmem:[#allocation5 + $0x1c8] sm:$0xff] %v1618
    %2131 = vst [vmem:[#allocation5 + $0x1d0] sm:$0xff] %v1619
    %2132 = vst [vmem:[#allocation5 + $0x1d8] sm:$0xff] %v1620
    %2133 = vst [vmem:[#allocation5 + $0x1e0] sm:$0xff] %v1621
    %2134 = vst [vmem:[#allocation5 + $0x1e8] sm:$0xff] %v1622
    %2135 = vst [vmem:[#allocation5 + $0x1f0] sm:$0xff] %v1623
    %2136 = vst [vmem:[#allocation5 + $0x1f8] sm:$0xff] %v1624
    %2137 = vst [vmem:[#allocation5 + $0x200] sm:$0xff] %v1625
    %2138 = vst [vmem:[#allocation5 + $0x208] sm:$0xff] %v1626
    %2139 = vst [vmem:[#allocation5 + $0x210] sm:$0xff] %v1627
    %2140 = vst [vmem:[#allocation5 + $0x218] sm:$0xff] %v1628
    %2141 = vst [vmem:[#allocation5 + $0x220] sm:$0xff] %v1629
    %2142 = vst [vmem:[#allocation5 + $0x228] sm:$0xff] %v1630
    %2143 = vst [vmem:[#allocation5 + $0x230] sm:$0xff] %v1631
    %2144 = vst [vmem:[#allocation5 + $0x238] sm:$0xff] %v1632
    %2145 = vst [vmem:[#allocation5 + $0x240] sm:$0xff] %v1633
    %2146 = vst [vmem:[#allocation5 + $0x248] sm:$0xff] %v1634
    %2147 = vst [vmem:[#allocation5 + $0x250] sm:$0xff] %v1635
    %2148 = vst [vmem:[#allocation5 + $0x258] sm:$0xff] %v1636
    %2149 = vst [vmem:[#allocation5 + $0x260] sm:$0xff] %v1637
    %2150 = vst [vmem:[#allocation5 + $0x268] sm:$0xff] %v1638
    %2151 = vst [vmem:[#allocation5 + $0x270] sm:$0xff] %v1639
    %2152 = vst [vmem:[#allocation5 + $0x278] sm:$0xff] %v1640
    %2153 = vst [vmem:[#allocation5 + $0x280] sm:$0xff] %v1641
    %2154 = vst [vmem:[#allocation5 + $0x288] sm:$0xff] %v1642
    %2155 = vst [vmem:[#allocation5 + $0x290] sm:$0xff] %v1643
    %2156 = vst [vmem:[#allocation5 + $0x298] sm:$0xff] %v1644
    %2157 = vst [vmem:[#allocation5 + $0x2a0] sm:$0xff] %v1645
    %2158 = vst [vmem:[#allocation5 + $0x2a8] sm:$0xff] %v1646
    %2159 = vst [vmem:[#allocation5 + $0x2b0] sm:$0xff] %v1647
    %2160 = vst [vmem:[#allocation5 + $0x2b8] sm:$0xff] %v1648
    %2161 = vst [vmem:[#allocation5 + $0x2c0] sm:$0xff] %v1649
    %2162 = vst [vmem:[#allocation5 + $0x2c8] sm:$0xff] %v1650
    %2163 = vst [vmem:[#allocation5 + $0x2d0] sm:$0xff] %v1651
    %2164 = vst [vmem:[#allocation5 + $0x2d8] sm:$0xff] %v1652
    %2165 = vst [vmem:[#allocation5 + $0x2e0] sm:$0xff] %v1653
    %2166 = vst [vmem:[#allocation5 + $0x2e8] sm:$0xff] %v1654
    %2167 = vst [vmem:[#allocation5 + $0x2f0] sm:$0xff] %v1655
    %2168 = vst [vmem:[#allocation5 + $0x2f8] sm:$0xff] %v1656
    %2169 = vst [vmem:[#allocation5 + $0x300] sm:$0xff] %v1657
    %2170 = vst [vmem:[#allocation5 + $0x308] sm:$0xff] %v1658
    %2171 = vst [vmem:[#allocation5 + $0x310] sm:$0xff] %v1659
    %2172 = vst [vmem:[#allocation5 + $0x318] sm:$0xff] %v1660
    %2173 = vst [vmem:[#allocation5 + $0x320] sm:$0xff] %v1661
    %2174 = vst [vmem:[#allocation5 + $0x328] sm:$0xff] %v1662
    %2175 = vst [vmem:[#allocation5 + $0x330] sm:$0xff] %v1663
    %2176 = vst [vmem:[#allocation5 + $0x338] sm:$0xff] %v1664
    %2177 = vst [vmem:[#allocation5 + $0x340] sm:$0xff] %v1665
    %2178 = vst [vmem:[#allocation5 + $0x348] sm:$0xff] %v1666
    %2179 = vst [vmem:[#allocation5 + $0x350] sm:$0xff] %v1667
    %2180 = vst [vmem:[#allocation5 + $0x358] sm:$0xff] %v1668
    %2181 = vst [vmem:[#allocation5 + $0x360] sm:$0xff] %v1669
    %2182 = vst [vmem:[#allocation5 + $0x368] sm:$0xff] %v1670
    %2183 = vst [vmem:[#allocation5 + $0x370] sm:$0xff] %v1671
    %2184 = vst [vmem:[#allocation5 + $0x378] sm:$0xff] %v1672
    %2185 = vst [vmem:[#allocation5 + $0x380] sm:$0xff] %v1673
    %2186 = vst [vmem:[#allocation5 + $0x388] sm:$0xff] %v1674
    %2187 = vst [vmem:[#allocation5 + $0x390] sm:$0xff] %v1675
    %2188 = vst [vmem:[#allocation5 + $0x398] sm:$0xff] %v1676
    %2189 = vst [vmem:[#allocation5 + $0x3a0] sm:$0xff] %v1677
    %2190 = vst [vmem:[#allocation5 + $0x3a8] sm:$0xff] %v1678
    %2191 = vst [vmem:[#allocation5 + $0x3b0] sm:$0xff] %v1679
    %2192 = vst [vmem:[#allocation5 + $0x3b8] sm:$0xff] %v1680
    %2193 = vst [vmem:[#allocation5 + $0x3c0] sm:$0xff] %v1681
    %2194 = vst [vmem:[#allocation5 + $0x3c8] sm:$0xff] %v1682
    %2195 = vst [vmem:[#allocation5 + $0x3d0] sm:$0xff] %v1683
    %2196 = vst [vmem:[#allocation5 + $0x3d8] sm:$0xff] %v1684
    %2197 = vst [vmem:[#allocation5 + $0x3e0] sm:$0xff] %v1685
    %2198 = vst [vmem:[#allocation5 + $0x3e8] sm:$0xff] %v1686
    %2199 = vst [vmem:[#allocation5 + $0x3f0] sm:$0xff] %v1687
    %2200 = vst [vmem:[#allocation5 + $0x3f8] sm:$0xff] %v1688
    %2201 = vst [vmem:[#allocation5 + $0x400] sm:$0xff] %v1689
    %2202 = vst [vmem:[#allocation5 + $0x408] sm:$0xff] %v1690
    %2203 = vst [vmem:[#allocation5 + $0x410] sm:$0xff] %v1691
    %2204 = vst [vmem:[#allocation5 + $0x418] sm:$0xff] %v1692
    %2205 = vst [vmem:[#allocation5 + $0x420] sm:$0xff] %v1693
    %2206 = vst [vmem:[#allocation5 + $0x428] sm:$0xff] %v1694
    %2207 = vst [vmem:[#allocation5 + $0x430] sm:$0xff] %v1695
    %2208 = vst [vmem:[#allocation5 + $0x438] sm:$0xff] %v1696
    %2209 = vst [vmem:[#allocation5 + $0x440] sm:$0xff] %v1697
    %2210 = vst [vmem:[#allocation5 + $0x448] sm:$0xff] %v1698
    %2211 = vst [vmem:[#allocation5 + $0x450] sm:$0xff] %v1699
    %2212 = vst [vmem:[#allocation5 + $0x458] sm:$0xff] %v1700
    %2213 = vst [vmem:[#allocation5 + $0x460] sm:$0xff] %v1701
    %2214 = vst [vmem:[#allocation5 + $0x468] sm:$0xff] %v1702
    %2215 = vst [vmem:[#allocation5 + $0x470] sm:$0xff] %v1703
    %2216 = vst [vmem:[#allocation5 + $0x478] sm:$0xff] %v1704
    %2217 = vst [vmem:[#allocation5 + $0x480] sm:$0xff] %v1705
    %2218 = vst [vmem:[#allocation5 + $0x488] sm:$0xff] %v1706
    %2219 = vst [vmem:[#allocation5 + $0x490] sm:$0xff] %v1707
    %2220 = vst [vmem:[#allocation5 + $0x498] sm:$0xff] %v1708
    %2221 = vst [vmem:[#allocation5 + $0x4a0] sm:$0xff] %v1709
    %2222 = vst [vmem:[#allocation5 + $0x4a8] sm:$0xff] %v1710
    %2223 = vst [vmem:[#allocation5 + $0x4b0] sm:$0xff] %v1711
    %2224 = vst [vmem:[#allocation5 + $0x4b8] sm:$0xff] %v1712
    %2225 = vst [vmem:[#allocation5 + $0x4c0] sm:$0xff] %v1713
    %2226 = vst [vmem:[#allocation5 + $0x4c8] sm:$0xff] %v1714
    %2227 = vst [vmem:[#allocation5 + $0x4d0] sm:$0xff] %v1715
    %2228 = vst [vmem:[#allocation5 + $0x4d8] sm:$0xff] %v1716
    %2229 = vst [vmem:[#allocation5 + $0x4e0] sm:$0xff] %v1717
    %2230 = vst [vmem:[#allocation5 + $0x4e8] sm:$0xff] %v1718
    %2231 = vst [vmem:[#allocation5 + $0x4f0] sm:$0xff] %v1719
    %2232 = vst [vmem:[#allocation5 + $0x4f8] sm:$0xff] %v1720
    %2233 = vst [vmem:[#allocation5 + $0x500] sm:$0xff] %v1721
    %2234 = vst [vmem:[#allocation5 + $0x508] sm:$0xff] %v1722
    %2235 = vst [vmem:[#allocation5 + $0x510] sm:$0xff] %v1723
    %2236 = vst [vmem:[#allocation5 + $0x518] sm:$0xff] %v1724
    %2237 = vst [vmem:[#allocation5 + $0x520] sm:$0xff] %v1725
    %2238 = vst [vmem:[#allocation5 + $0x528] sm:$0xff] %v1726
    %2239 = vst [vmem:[#allocation5 + $0x530] sm:$0xff] %v1727
    %2240 = vst [vmem:[#allocation5 + $0x538] sm:$0xff] %v1728
    %2241 = vst [vmem:[#allocation5 + $0x540] sm:$0xff] %v1729
    %2242 = vst [vmem:[#allocation5 + $0x548] sm:$0xff] %v1730
    %2243 = vst [vmem:[#allocation5 + $0x550] sm:$0xff] %v1731
    %2244 = vst [vmem:[#allocation5 + $0x558] sm:$0xff] %v1732
    %2245 = vst [vmem:[#allocation5 + $0x560] sm:$0xff] %v1733
    %2246 = vst [vmem:[#allocation5 + $0x568] sm:$0xff] %v1734
    %2247 = vst [vmem:[#allocation5 + $0x570] sm:$0xff] %v1735
    %2248 = vst [vmem:[#allocation5 + $0x578] sm:$0xff] %v1736
    %2249 = vst [vmem:[#allocation5 + $0x580] sm:$0xff] %v1737
    %2250 = vst [vmem:[#allocation5 + $0x588] sm:$0xff] %v1738
    %2251 = vst [vmem:[#allocation5 + $0x590] sm:$0xff] %v1739
    %2252 = vst [vmem:[#allocation5 + $0x598] sm:$0xff] %v1740
    %2253 = vst [vmem:[#allocation5 + $0x5a0] sm:$0xff] %v1741
    %2254 = vst [vmem:[#allocation5 + $0x5a8] sm:$0xff] %v1742
    %2255 = vst [vmem:[#allocation5 + $0x5b0] sm:$0xff] %v1743
    %2256 = vst [vmem:[#allocation5 + $0x5b8] sm:$0xff] %v1744
    %2257 = vst [vmem:[#allocation5 + $0x5c0] sm:$0xff] %v1745
    %2258 = vst [vmem:[#allocation5 + $0x5c8] sm:$0xff] %v1746
    %2259 = vst [vmem:[#allocation5 + $0x5d0] sm:$0xff] %v1747
    %2260 = vst [vmem:[#allocation5 + $0x5d8] sm:$0xff] %v1748
    %2261 = vst [vmem:[#allocation5 + $0x5e0] sm:$0xff] %v1749
    %2262 = vst [vmem:[#allocation5 + $0x5e8] sm:$0xff] %v1750
    %2263 = vst [vmem:[#allocation5 + $0x5f0] sm:$0xff] %v1751
    %2264 = vst [vmem:[#allocation5 + $0x5f8] sm:$0xff] %v1752
    %2265 = vst [vmem:[#allocation5 + $0x600] sm:$0xff] %v1753
    %2266 = vst [vmem:[#allocation5 + $0x608] sm:$0xff] %v1754
    %2267 = vst [vmem:[#allocation5 + $0x610] sm:$0xff] %v1755
    %2268 = vst [vmem:[#allocation5 + $0x618] sm:$0xff] %v1756
    %2269 = vst [vmem:[#allocation5 + $0x620] sm:$0xff] %v1757
    %2270 = vst [vmem:[#allocation5 + $0x628] sm:$0xff] %v1758
    %2271 = vst [vmem:[#allocation5 + $0x630] sm:$0xff] %v1759
    %2272 = vst [vmem:[#allocation5 + $0x638] sm:$0xff] %v1760
    %2273 = vst [vmem:[#allocation5 + $0x640] sm:$0xff] %v1761
    %2274 = vst [vmem:[#allocation5 + $0x648] sm:$0xff] %v1762
    %2275 = vst [vmem:[#allocation5 + $0x650] sm:$0xff] %v1763
    %2276 = vst [vmem:[#allocation5 + $0x658] sm:$0xff] %v1764
    %2277 = vst [vmem:[#allocation5 + $0x660] sm:$0xff] %v1765
    %2278 = vst [vmem:[#allocation5 + $0x668] sm:$0xff] %v1766
    %2279 = vst [vmem:[#allocation5 + $0x670] sm:$0xff] %v1767
    %2280 = vst [vmem:[#allocation5 + $0x678] sm:$0xff] %v1768
    %2281 = vst [vmem:[#allocation5 + $0x680] sm:$0xff] %v1769
    %2282 = vst [vmem:[#allocation5 + $0x688] sm:$0xff] %v1770
    %2283 = vst [vmem:[#allocation5 + $0x690] sm:$0xff] %v1771
    %2284 = vst [vmem:[#allocation5 + $0x698] sm:$0xff] %v1772
    %2285 = vst [vmem:[#allocation5 + $0x6a0] sm:$0xff] %v1773
    %2286 = vst [vmem:[#allocation5 + $0x6a8] sm:$0xff] %v1774
    %2287 = vst [vmem:[#allocation5 + $0x6b0] sm:$0xff] %v1775
    %2288 = vst [vmem:[#allocation5 + $0x6b8] sm:$0xff] %v1776
    %2289 = vst [vmem:[#allocation5 + $0x6c0] sm:$0xff] %v1777
    %2290 = vst [vmem:[#allocation5 + $0x6c8] sm:$0xff] %v1778
    %2291 = vst [vmem:[#allocation5 + $0x6d0] sm:$0xff] %v1779
    %2292 = vst [vmem:[#allocation5 + $0x6d8] sm:$0xff] %v1780
    %2293 = vst [vmem:[#allocation5 + $0x6e0] sm:$0xff] %v1781
    %2294 = vst [vmem:[#allocation5 + $0x6e8] sm:$0xff] %v1782
    %2295 = vst [vmem:[#allocation5 + $0x6f0] sm:$0xff] %v1783
    %2296 = vst [vmem:[#allocation5 + $0x6f8] sm:$0xff] %v1784
    %2297 = vst [vmem:[#allocation5 + $0x700] sm:$0xff] %v1785
    %2298 = vst [vmem:[#allocation5 + $0x708] sm:$0xff] %v1786
    %2299 = vst [vmem:[#allocation5 + $0x710] sm:$0xff] %v1787
    %2300 = vst [vmem:[#allocation5 + $0x718] sm:$0xff] %v1788
    %2301 = vst [vmem:[#allocation5 + $0x720] sm:$0xff] %v1789
    %2302 = vst [vmem:[#allocation5 + $0x728] sm:$0xff] %v1790
    %2303 = vst [vmem:[#allocation5 + $0x730] sm:$0xff] %v1791
    %2304 = vst [vmem:[#allocation5 + $0x738] sm:$0xff] %v1792
    %2305 = vst [vmem:[#allocation5 + $0x740] sm:$0xff] %v1793
    %2306 = vst [vmem:[#allocation5 + $0x748] sm:$0xff] %v1794
    %2307 = vst [vmem:[#allocation5 + $0x750] sm:$0xff] %v1795
    %2308 = vst [vmem:[#allocation5 + $0x758] sm:$0xff] %v1796
    %2309 = vst [vmem:[#allocation5 + $0x760] sm:$0xff] %v1797
    %2310 = vst [vmem:[#allocation5 + $0x768] sm:$0xff] %v1798
    %2311 = vst [vmem:[#allocation5 + $0x770] sm:$0xff] %v1799
    %2312 = vst [vmem:[#allocation5 + $0x778] sm:$0xff] %v1800
    %2313 = vst [vmem:[#allocation5 + $0x780] sm:$0xff] %v1801
    %2314 = vst [vmem:[#allocation5 + $0x788] sm:$0xff] %v1802
    %2315 = vst [vmem:[#allocation5 + $0x790] sm:$0xff] %v1803
    %2316 = vst [vmem:[#allocation5 + $0x798] sm:$0xff] %v1804
    %2317 = vst [vmem:[#allocation5 + $0x7a0] sm:$0xff] %v1805
    %2318 = vst [vmem:[#allocation5 + $0x7a8] sm:$0xff] %v1806
    %2319 = vst [vmem:[#allocation5 + $0x7b0] sm:$0xff] %v1807
    %2320 = vst [vmem:[#allocation5 + $0x7b8] sm:$0xff] %v1808
    %2321 = vst [vmem:[#allocation5 + $0x7c0] sm:$0xff] %v1809
    %2322 = vst [vmem:[#allocation5 + $0x7c8] sm:$0xff] %v1810
    %2323 = vst [vmem:[#allocation5 + $0x7d0] sm:$0xff] %v1811
    %2324 = vst [vmem:[#allocation5 + $0x7d8] sm:$0xff] %v1812
    %2325 = vst [vmem:[#allocation5 + $0x7e0] sm:$0xff] %v1813
    %2326 = vst [vmem:[#allocation5 + $0x7e8] sm:$0xff] %v1814
    %2327 = vst [vmem:[#allocation5 + $0x7f0] sm:$0xff] %v1815
    %2328 = vst [vmem:[#allocation5 + $0x7f8] sm:$0xff] %v1816
    %2329 = vst [vmem:[#allocation5 + $0x800] sm:$0xff] %v1817
    %2330 = vst [vmem:[#allocation5 + $0x808] sm:$0xff] %v1818
    %2331 = vst [vmem:[#allocation5 + $0x810] sm:$0xff] %v1819
    %2332 = vst [vmem:[#allocation5 + $0x818] sm:$0xff] %v1820
    %2333 = vst [vmem:[#allocation5 + $0x820] sm:$0xff] %v1821
    %2334 = vst [vmem:[#allocation5 + $0x828] sm:$0xff] %v1822
    %2335 = vst [vmem:[#allocation5 + $0x830] sm:$0xff] %v1823
    %2336 = vst [vmem:[#allocation5 + $0x838] sm:$0xff] %v1824
    %2337 = vst [vmem:[#allocation5 + $0x840] sm:$0xff] %v1825
    %2338 = vst [vmem:[#allocation5 + $0x848] sm:$0xff] %v1826
    %2339 = vst [vmem:[#allocation5 + $0x850] sm:$0xff] %v1827
    %2340 = vst [vmem:[#allocation5 + $0x858] sm:$0xff] %v1828
    %2341 = vst [vmem:[#allocation5 + $0x860] sm:$0xff] %v1829
    %2342 = vst [vmem:[#allocation5 + $0x868] sm:$0xff] %v1830
    %2343 = vst [vmem:[#allocation5 + $0x870] sm:$0xff] %v1831
    %2344 = vst [vmem:[#allocation5 + $0x878] sm:$0xff] %v1832
    %2345 = vst [vmem:[#allocation5 + $0x880] sm:$0xff] %v1833
    %2346 = vst [vmem:[#allocation5 + $0x888] sm:$0xff] %v1834
    %2347 = vst [vmem:[#allocation5 + $0x890] sm:$0xff] %v1835
    %2348 = vst [vmem:[#allocation5 + $0x898] sm:$0xff] %v1836
    %2349 = vst [vmem:[#allocation5 + $0x8a0] sm:$0xff] %v1837
    %2350 = vst [vmem:[#allocation5 + $0x8a8] sm:$0xff] %v1838
    %2351 = vst [vmem:[#allocation5 + $0x8b0] sm:$0xff] %v1839
    %2352 = vst [vmem:[#allocation5 + $0x8b8] sm:$0xff] %v1840
    %2353 = vst [vmem:[#allocation5 + $0x8c0] sm:$0xff] %v1841
    %2354 = vst [vmem:[#allocation5 + $0x8c8] sm:$0xff] %v1842
    %2355 = vst [vmem:[#allocation5 + $0x8d0] sm:$0xff] %v1843
    %2356 = vst [vmem:[#allocation5 + $0x8d8] sm:$0xff] %v1844
    %2357 = vst [vmem:[#allocation5 + $0x8e0] sm:$0xff] %v1845
    %2358 = vst [vmem:[#allocation5 + $0x8e8] sm:$0xff] %v1846
    %2359 = vst [vmem:[#allocation5 + $0x8f0] sm:$0xff] %v1847
    %2360 = vst [vmem:[#allocation5 + $0x8f8] sm:$0xff] %v1848
    %2361 = vst [vmem:[#allocation5 + $0x900] sm:$0xff] %v1849
    %2362 = vst [vmem:[#allocation5 + $0x908] sm:$0xff] %v1850
    %2363 = vst [vmem:[#allocation5 + $0x910] sm:$0xff] %v1851
    %2364 = vst [vmem:[#allocation5 + $0x918] sm:$0xff] %v1852
    %2365 = vst [vmem:[#allocation5 + $0x920] sm:$0xff] %v1853
    %2366 = vst [vmem:[#allocation5 + $0x928] sm:$0xff] %v1854
    %2367 = vst [vmem:[#allocation5 + $0x930] sm:$0xff] %v1855
    %2368 = vst [vmem:[#allocation5 + $0x938] sm:$0xff] %v1856
    %2369 = vst [vmem:[#allocation5 + $0x940] sm:$0xff] %v1857
    %2370 = vst [vmem:[#allocation5 + $0x948] sm:$0xff] %v1858
    %2371 = vst [vmem:[#allocation5 + $0x950] sm:$0xff] %v1859
    %2372 = vst [vmem:[#allocation5 + $0x958] sm:$0xff] %v1860
    %2373 = vst [vmem:[#allocation5 + $0x960] sm:$0xff] %v1861
    %2374 = vst [vmem:[#allocation5 + $0x968] sm:$0xff] %v1862
    %2375 = vst [vmem:[#allocation5 + $0x970] sm:$0xff] %v1863
    %2376 = vst [vmem:[#allocation5 + $0x978] sm:$0xff] %v1864
    %2377 = vst [vmem:[#allocation5 + $0x980] sm:$0xff] %v1865
    %2378 = vst [vmem:[#allocation5 + $0x988] sm:$0xff] %v1866
    %2379 = vst [vmem:[#allocation5 + $0x990] sm:$0xff] %v1867
    %2380 = vst [vmem:[#allocation5 + $0x998] sm:$0xff] %v1868
    %2381 = vst [vmem:[#allocation5 + $0x9a0] sm:$0xff] %v1869
    %2382 = vst [vmem:[#allocation5 + $0x9a8] sm:$0xff] %v1870
    %2383 = vst [vmem:[#allocation5 + $0x9b0] sm:$0xff] %v1871
    %2384 = vst [vmem:[#allocation5 + $0x9b8] sm:$0xff] %v1872
    %2385 = vst [vmem:[#allocation5 + $0x9c0] sm:$0xff] %v1873
    %2386 = vst [vmem:[#allocation5 + $0x9c8] sm:$0xff] %v1874
    %2387 = vst [vmem:[#allocation5 + $0x9d0] sm:$0xff] %v1875
    %2388 = vst [vmem:[#allocation5 + $0x9d8] sm:$0xff] %v1876
    %2389 = vst [vmem:[#allocation5 + $0x9e0] sm:$0xff] %v1877
    %2390 = vst [vmem:[#allocation5 + $0x9e8] sm:$0xff] %v1878
    %2391 = vst [vmem:[#allocation5 + $0x9f0] sm:$0xff] %v1879
    %2392 = vst [vmem:[#allocation5 + $0x9f8] sm:$0xff] %v1880
    %2393 = vst [vmem:[#allocation5 + $0xa00] sm:$0xff] %v1881
    %2394 = vst [vmem:[#allocation5 + $0xa08] sm:$0xff] %v1882
    %2395 = vst [vmem:[#allocation5 + $0xa10] sm:$0xff] %v1883
    %2396 = vst [vmem:[#allocation5 + $0xa18] sm:$0xff] %v1884
    %2397 = vst [vmem:[#allocation5 + $0xa20] sm:$0xff] %v1885
    %2398 = vst [vmem:[#allocation5 + $0xa28] sm:$0xff] %v1886
    %2399 = vst [vmem:[#allocation5 + $0xa30] sm:$0xff] %v1887
    %2400 = vst [vmem:[#allocation5 + $0xa38] sm:$0xff] %v1888
    %2401 = vst [vmem:[#allocation5 + $0xa40] sm:$0xff] %v1889
    %2402 = vst [vmem:[#allocation5 + $0xa48] sm:$0xff] %v1890
    %2403 = vst [vmem:[#allocation5 + $0xa50] sm:$0xff] %v1891
    %2404 = vst [vmem:[#allocation5 + $0xa58] sm:$0xff] %v1892
    %2405 = vst [vmem:[#allocation5 + $0xa60] sm:$0xff] %v1893
    %2406 = vst [vmem:[#allocation5 + $0xa68] sm:$0xff] %v1894
    %2407 = vst [vmem:[#allocation5 + $0xa70] sm:$0xff] %v1895
    %2408 = vst [vmem:[#allocation5 + $0xa78] sm:$0xff] %v1896
    %2409 = vst [vmem:[#allocation5 + $0xa80] sm:$0xff] %v1897
    %2410 = vst [vmem:[#allocation5 + $0xa88] sm:$0xff] %v1898
    %2411 = vst [vmem:[#allocation5 + $0xa90] sm:$0xff] %v1899
    %2412 = vst [vmem:[#allocation5 + $0xa98] sm:$0xff] %v1900
    %2413 = vst [vmem:[#allocation5 + $0xaa0] sm:$0xff] %v1901
    %2414 = vst [vmem:[#allocation5 + $0xaa8] sm:$0xff] %v1902
    %2415 = vst [vmem:[#allocation5 + $0xab0] sm:$0xff] %v1903
    %2416 = vst [vmem:[#allocation5 + $0xab8] sm:$0xff] %v1904
    %2417 = vst [vmem:[#allocation5 + $0xac0] sm:$0xff] %v1905
    %2418 = vst [vmem:[#allocation5 + $0xac8] sm:$0xff] %v1906
    %2419 = vst [vmem:[#allocation5 + $0xad0] sm:$0xff] %v1907
    %2420 = vst [vmem:[#allocation5 + $0xad8] sm:$0xff] %v1908
    %2421 = vst [vmem:[#allocation5 + $0xae0] sm:$0xff] %v1909
    %2422 = vst [vmem:[#allocation5 + $0xae8] sm:$0xff] %v1910
    %2423 = vst [vmem:[#allocation5 + $0xaf0] sm:$0xff] %v1911
    %2424 = vst [vmem:[#allocation5 + $0xaf8] sm:$0xff] %v1912
    %2425 = vst [vmem:[#allocation5 + $0xb00] sm:$0xff] %v1913
    %2426 = vst [vmem:[#allocation5 + $0xb08] sm:$0xff] %v1914
    %2427 = vst [vmem:[#allocation5 + $0xb10] sm:$0xff] %v1915
    %2428 = vst [vmem:[#allocation5 + $0xb18] sm:$0xff] %v1916
    %2429 = vst [vmem:[#allocation5 + $0xb20] sm:$0xff] %v1917
    %2430 = vst [vmem:[#allocation5 + $0xb28] sm:$0xff] %v1918
    %2431 = vst [vmem:[#allocation5 + $0xb30] sm:$0xff] %v1919
    %2432 = vst [vmem:[#allocation5 + $0xb38] sm:$0xff] %v1920
    %2433 = vst [vmem:[#allocation5 + $0xb40] sm:$0xff] %v1921
    %2434 = vst [vmem:[#allocation5 + $0xb48] sm:$0xff] %v1922
    %2435 = vst [vmem:[#allocation5 + $0xb50] sm:$0xff] %v1923
    %2436 = vst [vmem:[#allocation5 + $0xb58] sm:$0xff] %v1924
    %2437 = vst [vmem:[#allocation5 + $0xb60] sm:$0xff] %v1925
    %2438 = vst [vmem:[#allocation5 + $0xb68] sm:$0xff] %v1926
    %2439 = vst [vmem:[#allocation5 + $0xb70] sm:$0xff] %v1927
    %2440 = vst [vmem:[#allocation5 + $0xb78] sm:$0xff] %v1928
    %2441 = vst [vmem:[#allocation5 + $0xb80] sm:$0xff] %v1929
    %2442 = vst [vmem:[#allocation5 + $0xb88] sm:$0xff] %v1930
    %2443 = vst [vmem:[#allocation5 + $0xb90] sm:$0xff] %v1931
    %2444 = vst [vmem:[#allocation5 + $0xb98] sm:$0xff] %v1932
    %2445 = vst [vmem:[#allocation5 + $0xba0] sm:$0xff] %v1933
    %2446 = vst [vmem:[#allocation5 + $0xba8] sm:$0xff] %v1934
    %2447 = vst [vmem:[#allocation5 + $0xbb0] sm:$0xff] %v1935
    %2448 = vst [vmem:[#allocation5 + $0xbb8] sm:$0xff] %v1936
    %2449 = vst [vmem:[#allocation5 + $0xbc0] sm:$0xff] %v1937
    %2450 = vst [vmem:[#allocation5 + $0xbc8] sm:$0xff] %v1938
    %2451 = vst [vmem:[#allocation5 + $0xbd0] sm:$0xff] %v1939
    %2452 = vst [vmem:[#allocation5 + $0xbd8] sm:$0xff] %v1940
    %2453 = vst [vmem:[#allocation5 + $0xbe0] sm:$0xff] %v1941
    %2454 = vst [vmem:[#allocation5 + $0xbe8] sm:$0xff] %v1942
    %2455 = vst [vmem:[#allocation5 + $0xbf0] sm:$0xff] %v1943
    %2456 = vst [vmem:[#allocation5 + $0xbf8] sm:$0xff] %v1944
    %2457 = vst [vmem:[#allocation5 + $0xc00] sm:$0xff] %v1945
    %2458 = vst [vmem:[#allocation5 + $0xc08] sm:$0xff] %v1946
    %2459 = vst [vmem:[#allocation5 + $0xc10] sm:$0xff] %v1947
    %2460 = vst [vmem:[#allocation5 + $0xc18] sm:$0xff] %v1948
    %2461 = vst [vmem:[#allocation5 + $0xc20] sm:$0xff] %v1949
    %2462 = vst [vmem:[#allocation5 + $0xc28] sm:$0xff] %v1950
    %2463 = vst [vmem:[#allocation5 + $0xc30] sm:$0xff] %v1951
    %2464 = vst [vmem:[#allocation5 + $0xc38] sm:$0xff] %v1952
    %2465 = vst [vmem:[#allocation5 + $0xc40] sm:$0xff] %v1953
    %2466 = vst [vmem:[#allocation5 + $0xc48] sm:$0xff] %v1954
    %2467 = vst [vmem:[#allocation5 + $0xc50] sm:$0xff] %v1955
    %2468 = vst [vmem:[#allocation5 + $0xc58] sm:$0xff] %v1956
    %2469 = vst [vmem:[#allocation5 + $0xc60] sm:$0xff] %v1957
    %2470 = vst [vmem:[#allocation5 + $0xc68] sm:$0xff] %v1958
    %2471 = vst [vmem:[#allocation5 + $0xc70] sm:$0xff] %v1959
    %2472 = vst [vmem:[#allocation5 + $0xc78] sm:$0xff] %v1960
    %2473 = vst [vmem:[#allocation5 + $0xc80] sm:$0xff] %v1961
    %2474 = vst [vmem:[#allocation5 + $0xc88] sm:$0xff] %v1962
    %2475 = vst [vmem:[#allocation5 + $0xc90] sm:$0xff] %v1963
    %2476 = vst [vmem:[#allocation5 + $0xc98] sm:$0xff] %v1964
    %2477 = vst [vmem:[#allocation5 + $0xca0] sm:$0xff] %v1965
    %2478 = vst [vmem:[#allocation5 + $0xca8] sm:$0xff] %v1966
    %2479 = vst [vmem:[#allocation5 + $0xcb0] sm:$0xff] %v1967
    %2480 = vst [vmem:[#allocation5 + $0xcb8] sm:$0xff] %v1968
    %2481 = vst [vmem:[#allocation5 + $0xcc0] sm:$0xff] %v1969
    %2482 = vst [vmem:[#allocation5 + $0xcc8] sm:$0xff] %v1970
    %2483 = vst [vmem:[#allocation5 + $0xcd0] sm:$0xff] %v1971
    %2484 = vst [vmem:[#allocation5 + $0xcd8] sm:$0xff] %v1972
    %2485 = vst [vmem:[#allocation5 + $0xce0] sm:$0xff] %v1973
    %2486 = vst [vmem:[#allocation5 + $0xce8] sm:$0xff] %v1974
    %2487 = vst [vmem:[#allocation5 + $0xcf0] sm:$0xff] %v1975
    %2488 = vst [vmem:[#allocation5 + $0xcf8] sm:$0xff] %v1976
    %2489 = vst [vmem:[#allocation5 + $0xd00] sm:$0xff] %v1977
    %2490 = vst [vmem:[#allocation5 + $0xd08] sm:$0xff] %v1978
    %2491 = vst [vmem:[#allocation5 + $0xd10] sm:$0xff] %v1979
    %2492 = vst [vmem:[#allocation5 + $0xd18] sm:$0xff] %v1980
    %2493 = vst [vmem:[#allocation5 + $0xd20] sm:$0xff] %v1981
    %2494 = vst [vmem:[#allocation5 + $0xd28] sm:$0xff] %v1982
    %2495 = vst [vmem:[#allocation5 + $0xd30] sm:$0xff] %v1983
    %2496 = vst [vmem:[#allocation5 + $0xd38] sm:$0xff] %v1984
    %2497 = vst [vmem:[#allocation5 + $0xd40] sm:$0xff] %v1985
    %2498 = vst [vmem:[#allocation5 + $0xd48] sm:$0xff] %v1986
    %2499 = vst [vmem:[#allocation5 + $0xd50] sm:$0xff] %v1987
    %2500 = vst [vmem:[#allocation5 + $0xd58] sm:$0xff] %v1988
    %2501 = vst [vmem:[#allocation5 + $0xd60] sm:$0xff] %v1989
    %2502 = vst [vmem:[#allocation5 + $0xd68] sm:$0xff] %v1990
    %2503 = vst [vmem:[#allocation5 + $0xd70] sm:$0xff] %v1991
    %2504 = vst [vmem:[#allocation5 + $0xd78] sm:$0xff] %v1992
    %2505 = vst [vmem:[#allocation5 + $0xd80] sm:$0xff] %v1993
    %2506 = vst [vmem:[#allocation5 + $0xd88] sm:$0xff] %v1994
    %2507 = vst [vmem:[#allocation5 + $0xd90] sm:$0xff] %v1995
    %2508 = vst [vmem:[#allocation5 + $0xd98] sm:$0xff] %v1996
    %2509 = vst [vmem:[#allocation5 + $0xda0] sm:$0xff] %v1997
    %2510 = vst [vmem:[#allocation5 + $0xda8] sm:$0xff] %v1998
    %2511 = vst [vmem:[#allocation5 + $0xdb0] sm:$0xff] %v1999
    %2512 = vst [vmem:[#allocation5 + $0xdb8] sm:$0xff] %v2000
    %2513 = vst [vmem:[#allocation5 + $0xdc0] sm:$0xff] %v2001
    %2514 = vst [vmem:[#allocation5 + $0xdc8] sm:$0xff] %v2002
    %2515 = vst [vmem:[#allocation5 + $0xdd0] sm:$0xff] %v2003
    %2516 = vst [vmem:[#allocation5 + $0xdd8] sm:$0xff] %v2004
    %2517 = vst [vmem:[#allocation5 + $0xde0] sm:$0xff] %v2005
    %2518 = vst [vmem:[#allocation5 + $0xde8] sm:$0xff] %v2006
    %2519 = vst [vmem:[#allocation5 + $0xdf0] sm:$0xff] %v2007
    %2520 = vst [vmem:[#allocation5 + $0xdf8] sm:$0xff] %v2008
    %2521 = vst [vmem:[#allocation5 + $0xe00] sm:$0xff] %v2009
    %2522 = vst [vmem:[#allocation5 + $0xe08] sm:$0xff] %v2010
    %2523 = vst [vmem:[#allocation5 + $0xe10] sm:$0xff] %v2011
    %2524 = vst [vmem:[#allocation5 + $0xe18] sm:$0xff] %v2012
    %2525 = vst [vmem:[#allocation5 + $0xe20] sm:$0xff] %v2013
    %2526 = vst [vmem:[#allocation5 + $0xe28] sm:$0xff] %v2014
    %2527 = vst [vmem:[#allocation5 + $0xe30] sm:$0xff] %v2015
    %2528 = vst [vmem:[#allocation5 + $0xe38] sm:$0xff] %v2016
    %2529 = vst [vmem:[#allocation5 + $0xe40] sm:$0xff] %v2017
    %2530 = vst [vmem:[#allocation5 + $0xe48] sm:$0xff] %v2018
    %2531 = vst [vmem:[#allocation5 + $0xe50] sm:$0xff] %v2019
    %2532 = vst [vmem:[#allocation5 + $0xe58] sm:$0xff] %v2020
    %2533 = vst [vmem:[#allocation5 + $0xe60] sm:$0xff] %v2021
    %2534 = vst [vmem:[#allocation5 + $0xe68] sm:$0xff] %v2022
    %2535 = vst [vmem:[#allocation5 + $0xe70] sm:$0xff] %v2023
    %2536 = vst [vmem:[#allocation5 + $0xe78] sm:$0xff] %v2024
    %2537 = vst [vmem:[#allocation5 + $0xe80] sm:$0xff] %v2025
    %2538 = vst [vmem:[#allocation5 + $0xe88] sm:$0xff] %v2026
    %2539 = vst [vmem:[#allocation5 + $0xe90] sm:$0xff] %v2027
    %2540 = vst [vmem:[#allocation5 + $0xe98] sm:$0xff] %v2028
    %2541 = vst [vmem:[#allocation5 + $0xea0] sm:$0xff] %v2029
    %2542 = vst [vmem:[#allocation5 + $0xea8] sm:$0xff] %v2030
    %2543 = vst [vmem:[#allocation5 + $0xeb0] sm:$0xff] %v2031
    %2544 = vst [vmem:[#allocation5 + $0xeb8] sm:$0xff] %v2032
    %2545 = vst [vmem:[#allocation5 + $0xec0] sm:$0xff] %v2033
    %2546 = vst [vmem:[#allocation5 + $0xec8] sm:$0xff] %v2034
    %2547 = vst [vmem:[#allocation5 + $0xed0] sm:$0xff] %v2035
    %2548 = vst [vmem:[#allocation5 + $0xed8] sm:$0xff] %v2036
    %2549 = vst [vmem:[#allocation5 + $0xee0] sm:$0xff] %v2037
    %2550 = vst [vmem:[#allocation5 + $0xee8] sm:$0xff] %v2038
    %2551 = vst [vmem:[#allocation5 + $0xef0] sm:$0xff] %v2039
    %2552 = vst [vmem:[#allocation5 + $0xef8] sm:$0xff] %v2040
    %2553 = vst [vmem:[#allocation5 + $0xf00] sm:$0xff] %v2041
    %2554 = vst [vmem:[#allocation5 + $0xf08] sm:$0xff] %v2042
    %2555 = vst [vmem:[#allocation5 + $0xf10] sm:$0xff] %v2043
    %2556 = vst [vmem:[#allocation5 + $0xf18] sm:$0xff] %v2044
    %2557 = vst [vmem:[#allocation5 + $0xf20] sm:$0xff] %v2045
    %2558 = vst [vmem:[#allocation5 + $0xf28] sm:$0xff] %v2046
    %2559 = vst [vmem:[#allocation5 + $0xf30] sm:$0xff] %v2047
    %2560 = vst [vmem:[#allocation5 + $0xf38] sm:$0xff] %v2048
    %2561 = vst [vmem:[#allocation5 + $0xf40] sm:$0xff] %v2049
    %2562 = vst [vmem:[#allocation5 + $0xf48] sm:$0xff] %v2050
    %2563 = vst [vmem:[#allocation5 + $0xf50] sm:$0xff] %v2051
    %2564 = vst [vmem:[#allocation5 + $0xf58] sm:$0xff] %v2052
    %2565 = vst [vmem:[#allocation5 + $0xf60] sm:$0xff] %v2053
    %2566 = vst [vmem:[#allocation5 + $0xf68] sm:$0xff] %v2054
    %2567 = vst [vmem:[#allocation5 + $0xf70] sm:$0xff] %v2055
    %2568 = vst [vmem:[#allocation5 + $0xf78] sm:$0xff] %v2056
    %2569 = vst [vmem:[#allocation5 + $0xf80] sm:$0xff] %v2057
    %2570 = vst [vmem:[#allocation5 + $0xf88] sm:$0xff] %v2058
    %2571 = vst [vmem:[#allocation5 + $0xf90] sm:$0xff] %v2059
    %2572 = vst [vmem:[#allocation5 + $0xf98] sm:$0xff] %v2060
    %2573 = vst [vmem:[#allocation5 + $0xfa0] sm:$0xff] %v2061
    %2574 = vst [vmem:[#allocation5 + $0xfa8] sm:$0xff] %v2062
    %2575 = vst [vmem:[#allocation5 + $0xfb0] sm:$0xff] %v2063
    %2576 = vst [vmem:[#allocation5 + $0xfb8] sm:$0xff] %v2064
    %2577 = vst [vmem:[#allocation5 + $0xfc0] sm:$0xff] %v2065
    %2578 = vst [vmem:[#allocation5 + $0xfc8] sm:$0xff] %v2066
    %2579 = vst [vmem:[#allocation5 + $0xfd0] sm:$0xff] %v2067
    %2580 = vst [vmem:[#allocation5 + $0xfd8] sm:$0xff] %v2068
    %2581 = vst [vmem:[#allocation5 + $0xfe0] sm:$0xff] %v2069
    %2582 = vst [vmem:[#allocation5 + $0xfe8] sm:$0xff] %v2070
    %2583 = vst [vmem:[#allocation5 + $0xff0] sm:$0xff] %v2071
    %2584 = vst [vmem:[#allocation5 + $0xff8] sm:$0xff] %v2072
    // Predicated region
    $region10: #{tpu_custom_call.1} parent=1 // pred_check
      _
    $region11: #{tpu_custom_call.1} parent=1 // pred_check_branch
      %2586 = sbr.rel (0) target = $region13
    $region12: #{tpu_custom_call.1} parent=1 // pred_region
      %2588 = vsyncadd [#allocation4], 0
      %s2589 = sshll.u32 [#allocation5], 4
      %s2590 = int_to_ptr.vmem [resolvable:$true] %s2589
      %s2591 = sshll.u32 %s1, 4
      %s2592 = int_to_ptr.hbm [resolvable:$true] %s2591
      %2597 = dma.vmem_to_hbm [thread:$0]  %s2590, 65536, %s2592, [#allocation4], 8192, 8192, 512
    $region13: #{tpu_custom_call.1} parent=1 // pred_fallthru
      _
    // Predicated region
    $region14: #{tpu_custom_call.1} parent=1 // pred_check
      _
    $region15: #{tpu_custom_call.1} parent=1 // pred_check_branch
      %2599 = sbr.rel (0) target = $region17
    $region16: #{tpu_custom_call.1} parent=1 // pred_region
      %2601 = dma.done [#allocation4], 65536
    $region17: #{tpu_custom_call.1} parent=1 // pred_fallthru
      _
    %2602 = vsyncpa [#allocation3], 1
    %2603 = vsyncpa [#allocation4], 1

</llo_original>
